<compile_context>
chip_gen: v6e
topology: v6e:2x2x1
jax: 0.10.0
libtpu: 0.0.40
codegen_flags: <defaults>
</compile_context>

<pallas_src>
import functools

import jax
import jax.numpy as jnp
from jax.experimental import pallas as pl
from jax.experimental.pallas import tpu as pltpu


# ------------------------------ Pallas kernel ------------------------------ #

def _conblock_kernel(x_ref, w1_ref, w2_ref, mask_ref, out_ref,
                     tap1_ref, tap2_ref, *, H, W, TB, eps):
    """Fused Conv3x3 -> IN -> ReLU -> Conv3x3 -> IN -> ReLU for TB samples.

    x_ref:    (TB, C_in, S)     raw input block (S = H*W), no im2col
    w1_ref:   (C_mid, 9*C_in)   conv1 weights, stacked tap-major (col = k*C_in + c)
    w2_ref:   (C_out, 9*C_mid)  conv2 weights, same packing
    mask_ref: (9, 1, L)         per-tap boundary masks, tiled over TB samples
    out_ref:  (TB, C_out, S)
    tap*_ref: (9*C, L)          VMEM scratch holding the stacked, shifted taps
    """
    S = H * W
    L = TB * S
    inv_S = 1.0 / float(S)

    C_in = x_ref.shape[1]
    C_mid = w1_ref.shape[0]

    def stack_taps(src, tap_ref, C):
        # src: (C, L).  Write the 9 shifted+masked 3x3 taps into tap_ref (9C, L).
        # Rolling over the whole lane axis is safe: any position whose source
        # crosses an image-row or sample boundary is zeroed by the mask.
        for k in range(9):
            dh, dw = k // 3 - 1, k % 3 - 1
            off = dh * W + dw                       # flat spatial shift
            if off == 0:
                tap = src                           # centre tap: mask is all-ones
            else:
                tap = pltpu.roll(src, shift=(-off) % L, axis=1) * mask_ref[k]
            tap_ref[k * C:(k + 1) * C, :] = tap.astype(tap_ref.dtype)

    def inorm_relu(y):
        # Per-(sample, channel) InstanceNorm (biased variance, single reduction
        # pass: E[x^2] - m^2) fused with ReLU.  y: (C, L).
        parts = []
        for t in range(TB):
            yt = y[:, t * S:(t + 1) * S]
            s = jnp.sum(yt, axis=-1, keepdims=True)
            ss = jnp.sum(yt * yt, axis=-1, keepdims=True)
            m = s * inv_S
            v = ss * inv_S - m * m
            r = jax.lax.rsqrt(v + eps)
            parts.append(jnp.maximum(yt * r - m * r, 0.0))
        return parts[0] if TB == 1 else jnp.concatenate(parts, axis=1)

    # Lane-concatenate the TB samples: (C_in, L).
    xcat = (x_ref[0] if TB == 1
            else jnp.concatenate([x_ref[t] for t in range(TB)], axis=1))

    # ---- conv1: stacked taps -> single (C_mid, 9*C_in) x (9*C_in, L) dot ----
    # (conv bias omitted: cancelled exactly by the following InstanceNorm)
    stack_taps(xcat.astype(jnp.float32), tap1_ref, C_in)
    y1 = jnp.dot(w1_ref[...], tap1_ref[...], preferred_element_type=jnp.float32)
    h1 = inorm_relu(y1)                             # (C_mid, L)

    # ---- conv2: stacked taps -> single (C_out, 9*C_mid) x (9*C_mid, L) dot ----
    stack_taps(h1, tap2_ref, C_mid)
    y2 = jnp.dot(w2_ref[...], tap2_ref[...], preferred_element_type=jnp.float32)
    o = inorm_relu(y2)                              # (C_out, L)

    for t in range(TB):
        out_ref[t] = o[:, t * S:(t + 1) * S].astype(out_ref.dtype)


# ------------------------------ JAX wrapper -------------------------------- #

def _pick_samples_per_step(B, C_in, C_mid, C_out, S,
                           vmem_budget_bytes=12 << 20):
    """Largest TB dividing B such that the parallel grid keeps >= 2 steps
    (both v7x TensorCores busy) and the per-step working set stays well inside
    VMEM (budgeted far below v7x's 64 MiB physical / 32 MiB scoped limit)."""
    per_sample = 4 * S * (4 * (C_in + C_out)          # double-buffered in/out blocks
                          + 9 * (C_in + C_mid)        # stacked-tap scratches
                          + 2 * (C_mid + C_out)       # live conv / IN values
                          + C_in + 18)                # lane-concat input + masks
    best = 1
    for tb in range(1, B + 1):
        if B % tb:
            continue
        if B >= 2 and B // tb < 2:          # keep >= 2 parallel grid steps
            continue
        if tb * per_sample > vmem_budget_bytes:
            continue
        best = tb
    return best


def con_block_2d(x, params, *, eps=1e-5, matmul_dtype=jnp.float32,
                 vmem_limit_bytes=32 << 20):
    """x: (B, C_in, H, W) float32. Returns (B, C_out, H, W)."""
    B, C_in, H, W = x.shape
    S = H * W
    w1 = params["w1"]                      # (C_mid, C_in, 3, 3)
    w2 = params["w2"]                      # (C_out, C_mid, 3, 3)
    # params["b1"], params["b2"] are intentionally unused: conv bias is exactly
    # cancelled by InstanceNorm2d(affine=False) that immediately follows it.
    C_mid, C_out = w1.shape[0], w2.shape[0]

    TB = _pick_samples_per_step(B, C_in, C_mid, C_out, S)
    L = TB * S

    # Stacked weight packing: column index = k*C + c with k = 3*(dh+1)+(dw+1).
    w1_mat = jnp.transpose(w1, (0, 2, 3, 1)).reshape(C_mid, 9 * C_in).astype(matmul_dtype)
    w2_mat = jnp.transpose(w2, (0, 2, 3, 1)).reshape(C_out, 9 * C_mid).astype(matmul_dtype)

    # Per-tap boundary masks over the flattened spatial axis, tiled over the TB
    # samples sharing a grid step (also zeroes any roll wrap across samples).
    hh = jnp.arange(H)[:, None]
    ww = jnp.arange(W)[None, :]
    masks = []
    for dh in range(3):
        for dw in range(3):
            vh = (hh + dh - 1 >= 0) & (hh + dh - 1 < H)
            vw = (ww + dw - 1 >= 0) & (ww + dw - 1 < W)
            masks.append((vh & vw).astype(jnp.float32).reshape(1, S))
    tap_mask = jnp.tile(jnp.stack(masks, axis=0), (1, 1, TB))      # (9, 1, L)

    x_flat = x.reshape(B, C_in, S)        # pure reshape, no extra HBM copy

    kernel = functools.partial(_conblock_kernel, H=H, W=W, TB=TB, eps=eps)

    cost = pl.CostEstimate(
        flops=2 * B * S * 9 * (C_mid * C_in + C_out * C_mid),
        transcendentals=B * (C_mid + C_out),
        bytes_accessed=4 * (B * (C_in + C_out) * S
                            + C_mid * 9 * C_in + C_out * 9 * C_mid + 9 * L))

    out_flat = pl.pallas_call(
        kernel,
        out_shape=jax.ShapeDtypeStruct((B, C_out, S), x.dtype),
        grid_spec=pltpu.PrefetchScalarGridSpec(
            num_scalar_prefetch=0,
            grid=(B // TB,),
            in_specs=[
                pl.BlockSpec((TB, C_in, S), lambda i: (i, 0, 0)),
                pl.BlockSpec((C_mid, 9 * C_in), lambda i: (0, 0)),
                pl.BlockSpec((C_out, 9 * C_mid), lambda i: (0, 0)),
                pl.BlockSpec((9, 1, L), lambda i: (0, 0, 0)),
            ],
            out_specs=pl.BlockSpec((TB, C_out, S), lambda i: (i, 0, 0)),
            scratch_shapes=[
                pltpu.VMEM((9 * C_in, L), matmul_dtype),
                pltpu.VMEM((9 * C_mid, L), matmul_dtype),
            ],
        ),
        compiler_params=pltpu.CompilerParams(
            dimension_semantics=("parallel",),
            vmem_limit_bytes=vmem_limit_bytes),
        cost_estimate=cost,
    )(x_flat, w1_mat, w2_mat, tap_mask)

    return out_flat.reshape(B, C_out, H, W)


# --------------------------- Pure-JAX reference ----------------------------- #

def _reference(x, params, eps=1e-5):
    def conv3x3(inp, w, b):
        B_, _, H_, W_ = inp.shape
        xp = jnp.pad(inp, ((0, 0), (0, 0), (1, 1), (1, 1)))
        y = jnp.zeros((B_, w.shape[0], H_, W_), jnp.float32) + b[None, :, None, None]
        for i in range(3):
            for j in range(3):
                y = y + jnp.einsum("oc,bchw->bohw", w[:, :, i, j],
                                   xp[:, :, i:i + H_, j:j + W_])
        return y

    def inorm_relu(y):
        m = y.mean(axis=(2, 3), keepdims=True)
        v = ((y - m) ** 2).mean(axis=(2, 3), keepdims=True)
        return jnp.maximum((y - m) / jnp.sqrt(v + eps), 0.0)

    h = inorm_relu(conv3x3(x, params["w1"], params["b1"]))
    return inorm_relu(conv3x3(h, params["w2"], params["b2"]))


# ---------------------------------- main ------------------------------------ #

if __name__ == "__main__":
    # in_ch=4, mid_ch=8, out_ch=4; num_features irrelevant (InstanceNorm2d has
    # no parameters).  Two batch sizes exercise both the multi-sample-per-step
    # path (B=4 -> TB=2, grid=2) and the single-sample path (B=2 -> TB=1).
    configs = [
        (4, 4, 8, 4, 16, 16),
        (2, 4, 8, 4, 16, 16),
    ]
    root = jax.random.PRNGKey(0)
    fwd = jax.jit(con_block_2d)

    for idx, (B, C_IN, C_MID, C_OUT, H, W) in enumerate(configs):
        kx, kw1, kb1, kw2, kb2 = jax.random.split(jax.random.fold_in(root, idx), 5)
        x = jax.random.normal(kx, (B, C_IN, H, W), dtype=jnp.float32)
        params = {
            "w1": 0.1 * jax.random.normal(kw1, (C_MID, C_IN, 3, 3), dtype=jnp.float32),
            "b1": 0.1 * jax.random.normal(kb1, (C_MID,), dtype=jnp.float32),
            "w2": 0.1 * jax.random.normal(kw2, (C_OUT, C_MID, 3, 3), dtype=jnp.float32),
            "b2": 0.1 * jax.random.normal(kb2, (C_OUT,), dtype=jnp.float32),
        }

        out = jax.block_until_ready(fwd(x, params))
        ref = _reference(x, params)

        assert out.shape == (B, C_OUT, H, W)
        max_err = float(jnp.max(jnp.abs(out - ref)))
        assert jnp.allclose(out, ref, rtol=1e-3, atol=1e-3), max_err

    print("KERNEL_OK")
</pallas_src>

<mosaic_0001>
module attributes {stable_mosaic.version = 11 : i64} {
  func.func @_conblock_kernel(%arg0: i32, %arg1: memref<2x4x256xf32, #tpu.memory_space<vmem>>, %arg2: memref<8x36xf32, #tpu.memory_space<vmem>>, %arg3: memref<4x72xf32, #tpu.memory_space<vmem>>, %arg4: memref<9x1x512xf32, #tpu.memory_space<vmem>>, %arg5: memref<2x4x256xf32, #tpu.memory_space<vmem>>, %arg6: memref<36x512xf32, #tpu.memory_space<vmem>>, %arg7: memref<72x512xf32, #tpu.memory_space<vmem>>) attributes {dimension_semantics = [#tpu.dimension_semantics<parallel>], iteration_bounds = array<i64: 2>, scalar_prefetch = 0 : i64, scratch_operands = 2 : i64, tpu.core_type = #tpu.core_type<tc>, window_params = [{transform_indices = @transform_0, window_bounds = array<i64: 2, 4, 256>}, {pipeline_mode = #tpu.pipeline_mode<synchronous>, transform_indices = @transform_1, window_bounds = array<i64: 8, 36>}, {pipeline_mode = #tpu.pipeline_mode<synchronous>, transform_indices = @transform_2, window_bounds = array<i64: 4, 72>}, {pipeline_mode = #tpu.pipeline_mode<synchronous>, transform_indices = @transform_3, window_bounds = array<i64: 9, 1, 512>}, {transform_indices = @transform_4, window_bounds = array<i64: 2, 4, 256>}]} {
    %c0 = arith.constant 0 : index
    %c0_0 = arith.constant 0 : index
    %c0_1 = arith.constant 0 : index
    %0 = vector.load %arg1[%c0, %c0_0, %c0_1] : memref<2x4x256xf32, #tpu.memory_space<vmem>>, vector<1x4x256xf32>
    %1 = vector.shape_cast %0 : vector<1x4x256xf32> to vector<4x256xf32>
    %c1 = arith.constant 1 : index
    %c0_2 = arith.constant 0 : index
    %c0_3 = arith.constant 0 : index
    %2 = vector.load %arg1[%c1, %c0_2, %c0_3] : memref<2x4x256xf32, #tpu.memory_space<vmem>>, vector<1x4x256xf32>
    %3 = vector.shape_cast %2 : vector<1x4x256xf32> to vector<4x256xf32>
    %4 = tpu.concatenate %1, %3 in 1 : vector<4x256xf32>, vector<4x256xf32> -> vector<4x512xf32>
    %c17_i32 = arith.constant 17 : i32
    %5 = tpu.dynamic_rotate %4 by %c17_i32 dim 1 : vector<4x512xf32>, i32 -> vector<4x512xf32>
    %c0_4 = arith.constant 0 : index
    %c0_5 = arith.constant 0 : index
    %c0_6 = arith.constant 0 : index
    %6 = vector.load %arg4[%c0_4, %c0_5, %c0_6] : memref<9x1x512xf32, #tpu.memory_space<vmem>>, vector<1x1x512xf32>
    %7 = vector.shape_cast %6 : vector<1x1x512xf32> to vector<1x512xf32>
    %8 = vector.broadcast %7 : vector<1x512xf32> to vector<4x512xf32>
    %9 = arith.mulf %5, %8 : vector<4x512xf32>
    %c0_7 = arith.constant 0 : index
    %c0_8 = arith.constant 0 : index
    %10 = vector.load %arg6[%c0_7, %c0_8] : memref<36x512xf32, #tpu.memory_space<vmem>>, vector<4x512xf32>
    tpu.vector_store %arg6[%c0_7, %c0_8], %9 {strides = array<i32>} : memref<36x512xf32, #tpu.memory_space<vmem>>, vector<4x512xf32>,
    %c16_i32 = arith.constant 16 : i32
    %11 = tpu.dynamic_rotate %4 by %c16_i32 dim 1 : vector<4x512xf32>, i32 -> vector<4x512xf32>
    %c1_9 = arith.constant 1 : index
    %c0_10 = arith.constant 0 : index
    %c0_11 = arith.constant 0 : index
    %12 = vector.load %arg4[%c1_9, %c0_10, %c0_11] : memref<9x1x512xf32, #tpu.memory_space<vmem>>, vector<1x1x512xf32>
    %13 = vector.shape_cast %12 : vector<1x1x512xf32> to vector<1x512xf32>
    %14 = vector.broadcast %13 : vector<1x512xf32> to vector<4x512xf32>
    %15 = arith.mulf %11, %14 : vector<4x512xf32>
    %c4 = arith.constant 4 : index
    %c0_12 = arith.constant 0 : index
    %16 = vector.load %arg6[%c4, %c0_12] : memref<36x512xf32, #tpu.memory_space<vmem>>, vector<4x512xf32>
    tpu.vector_store %arg6[%c4, %c0_12], %15 {strides = array<i32>} : memref<36x512xf32, #tpu.memory_space<vmem>>, vector<4x512xf32>,
    %c15_i32 = arith.constant 15 : i32
    %17 = tpu.dynamic_rotate %4 by %c15_i32 dim 1 : vector<4x512xf32>, i32 -> vector<4x512xf32>
    %c2 = arith.constant 2 : index
    %c0_13 = arith.constant 0 : index
    %c0_14 = arith.constant 0 : index
    %18 = vector.load %arg4[%c2, %c0_13, %c0_14] : memref<9x1x512xf32, #tpu.memory_space<vmem>>, vector<1x1x512xf32>
    %19 = vector.shape_cast %18 : vector<1x1x512xf32> to vector<1x512xf32>
    %20 = vector.broadcast %19 : vector<1x512xf32> to vector<4x512xf32>
    %21 = arith.mulf %17, %20 : vector<4x512xf32>
    %c8 = arith.constant 8 : index
    %c0_15 = arith.constant 0 : index
    %22 = vector.load %arg6[%c8, %c0_15] : memref<36x512xf32, #tpu.memory_space<vmem>>, vector<4x512xf32>
    tpu.vector_store %arg6[%c8, %c0_15], %21 {strides = array<i32>} : memref<36x512xf32, #tpu.memory_space<vmem>>, vector<4x512xf32>,
    %c1_i32 = arith.constant 1 : i32
    %23 = tpu.dynamic_rotate %4 by %c1_i32 dim 1 : vector<4x512xf32>, i32 -> vector<4x512xf32>
    %c3 = arith.constant 3 : index
    %c0_16 = arith.constant 0 : index
    %c0_17 = arith.constant 0 : index
    %24 = vector.load %arg4[%c3, %c0_16, %c0_17] : memref<9x1x512xf32, #tpu.memory_space<vmem>>, vector<1x1x512xf32>
    %25 = vector.shape_cast %24 : vector<1x1x512xf32> to vector<1x512xf32>
    %26 = vector.broadcast %25 : vector<1x512xf32> to vector<4x512xf32>
    %27 = arith.mulf %23, %26 : vector<4x512xf32>
    %c12 = arith.constant 12 : index
    %c0_18 = arith.constant 0 : index
    %28 = vector.load %arg6[%c12, %c0_18] : memref<36x512xf32, #tpu.memory_space<vmem>>, vector<4x512xf32>
    tpu.vector_store %arg6[%c12, %c0_18], %27 {strides = array<i32>} : memref<36x512xf32, #tpu.memory_space<vmem>>, vector<4x512xf32>,
    %c16 = arith.constant 16 : index
    %c0_19 = arith.constant 0 : index
    %29 = vector.load %arg6[%c16, %c0_19] : memref<36x512xf32, #tpu.memory_space<vmem>>, vector<4x512xf32>
    tpu.vector_store %arg6[%c16, %c0_19], %4 {strides = array<i32>} : memref<36x512xf32, #tpu.memory_space<vmem>>, vector<4x512xf32>,
    %c511_i32 = arith.constant 511 : i32
    %30 = tpu.dynamic_rotate %4 by %c511_i32 dim 1 : vector<4x512xf32>, i32 -> vector<4x512xf32>
    %c5 = arith.constant 5 : index
    %c0_20 = arith.constant 0 : index
    %c0_21 = arith.constant 0 : index
    %31 = vector.load %arg4[%c5, %c0_20, %c0_21] : memref<9x1x512xf32, #tpu.memory_space<vmem>>, vector<1x1x512xf32>
    %32 = vector.shape_cast %31 : vector<1x1x512xf32> to vector<1x512xf32>
    %33 = vector.broadcast %32 : vector<1x512xf32> to vector<4x512xf32>
    %34 = arith.mulf %30, %33 : vector<4x512xf32>
    %c20 = arith.constant 20 : index
    %c0_22 = arith.constant 0 : index
    %35 = vector.load %arg6[%c20, %c0_22] : memref<36x512xf32, #tpu.memory_space<vmem>>, vector<4x512xf32>
    tpu.vector_store %arg6[%c20, %c0_22], %34 {strides = array<i32>} : memref<36x512xf32, #tpu.memory_space<vmem>>, vector<4x512xf32>,
    %c497_i32 = arith.constant 497 : i32
    %36 = tpu.dynamic_rotate %4 by %c497_i32 dim 1 : vector<4x512xf32>, i32 -> vector<4x512xf32>
    %c6 = arith.constant 6 : index
    %c0_23 = arith.constant 0 : index
    %c0_24 = arith.constant 0 : index
    %37 = vector.load %arg4[%c6, %c0_23, %c0_24] : memref<9x1x512xf32, #tpu.memory_space<vmem>>, vector<1x1x512xf32>
    %38 = vector.shape_cast %37 : vector<1x1x512xf32> to vector<1x512xf32>
    %39 = vector.broadcast %38 : vector<1x512xf32> to vector<4x512xf32>
    %40 = arith.mulf %36, %39 : vector<4x512xf32>
    %c24 = arith.constant 24 : index
    %c0_25 = arith.constant 0 : index
    %41 = vector.load %arg6[%c24, %c0_25] : memref<36x512xf32, #tpu.memory_space<vmem>>, vector<4x512xf32>
    tpu.vector_store %arg6[%c24, %c0_25], %40 {strides = array<i32>} : memref<36x512xf32, #tpu.memory_space<vmem>>, vector<4x512xf32>,
    %c496_i32 = arith.constant 496 : i32
    %42 = tpu.dynamic_rotate %4 by %c496_i32 dim 1 : vector<4x512xf32>, i32 -> vector<4x512xf32>
    %c7 = arith.constant 7 : index
    %c0_26 = arith.constant 0 : index
    %c0_27 = arith.constant 0 : index
    %43 = vector.load %arg4[%c7, %c0_26, %c0_27] : memref<9x1x512xf32, #tpu.memory_space<vmem>>, vector<1x1x512xf32>
    %44 = vector.shape_cast %43 : vector<1x1x512xf32> to vector<1x512xf32>
    %45 = vector.broadcast %44 : vector<1x512xf32> to vector<4x512xf32>
    %46 = arith.mulf %42, %45 : vector<4x512xf32>
    %c28 = arith.constant 28 : index
    %c0_28 = arith.constant 0 : index
    %47 = vector.load %arg6[%c28, %c0_28] : memref<36x512xf32, #tpu.memory_space<vmem>>, vector<4x512xf32>
    tpu.vector_store %arg6[%c28, %c0_28], %46 {strides = array<i32>} : memref<36x512xf32, #tpu.memory_space<vmem>>, vector<4x512xf32>,
    %c495_i32 = arith.constant 495 : i32
    %48 = tpu.dynamic_rotate %4 by %c495_i32 dim 1 : vector<4x512xf32>, i32 -> vector<4x512xf32>
    %c8_29 = arith.constant 8 : index
    %c0_30 = arith.constant 0 : index
    %c0_31 = arith.constant 0 : index
    %49 = vector.load %arg4[%c8_29, %c0_30, %c0_31] : memref<9x1x512xf32, #tpu.memory_space<vmem>>, vector<1x1x512xf32>
    %50 = vector.shape_cast %49 : vector<1x1x512xf32> to vector<1x512xf32>
    %51 = vector.broadcast %50 : vector<1x512xf32> to vector<4x512xf32>
    %52 = arith.mulf %48, %51 : vector<4x512xf32>
    %c32 = arith.constant 32 : index
    %c0_32 = arith.constant 0 : index
    %53 = vector.load %arg6[%c32, %c0_32] : memref<36x512xf32, #tpu.memory_space<vmem>>, vector<4x512xf32>
    tpu.vector_store %arg6[%c32, %c0_32], %52 {strides = array<i32>} : memref<36x512xf32, #tpu.memory_space<vmem>>, vector<4x512xf32>,
    %c0_33 = arith.constant 0 : index
    %c0_34 = arith.constant 0 : index
    %54 = vector.load %arg2[%c0_33, %c0_34] : memref<8x36xf32, #tpu.memory_space<vmem>>, vector<8x36xf32>
    %c0_35 = arith.constant 0 : index
    %c0_36 = arith.constant 0 : index
    %55 = vector.load %arg6[%c0_35, %c0_36] : memref<36x512xf32, #tpu.memory_space<vmem>>, vector<36x512xf32>
    %cst = arith.constant dense<0.000000e+00> : vector<8x512xf32>
    %56 = tpu.matmul %54, %55, %cst {dimension_numbers = #tpu.dot_dimension_numbers<[1], [0], [0], [1], [0, 0, 1, 1], [], []>} : vector<8x36xf32>, vector<36x512xf32>, vector<8x512xf32> -> vector<8x512xf32>
    %57 = vector.extract_strided_slice %56 {offsets = [0, 0], sizes = [8, 256], strides = [1, 1]} : vector<8x512xf32> to vector<8x256xf32>
    %cst_37 = arith.constant dense<0.000000e+00> : vector<8xf32>
    %58 = vector.multi_reduction <add>, %57, %cst_37 [1] : vector<8x256xf32> to vector<8xf32>
    %59 = vector.shape_cast %58 : vector<8xf32> to vector<8x1xf32>
    %60 = arith.mulf %57, %57 : vector<8x256xf32>
    %cst_38 = arith.constant dense<0.000000e+00> : vector<8xf32>
    %61 = vector.multi_reduction <add>, %60, %cst_38 [1] : vector<8x256xf32> to vector<8xf32>
    %62 = vector.shape_cast %61 : vector<8xf32> to vector<8x1xf32>
    %cst_39 = arith.constant 3.906250e-03 : f32
    %63 = vector.broadcast %cst_39 : f32 to vector<8x1xf32>
    %64 = arith.mulf %59, %63 : vector<8x1xf32>
    %cst_40 = arith.constant 3.906250e-03 : f32
    %65 = vector.broadcast %cst_40 : f32 to vector<8x1xf32>
    %66 = arith.mulf %62, %65 : vector<8x1xf32>
    %67 = arith.mulf %64, %64 : vector<8x1xf32>
    %68 = arith.subf %66, %67 : vector<8x1xf32>
    %cst_41 = arith.constant 9.99999974E-6 : f32
    %69 = vector.broadcast %cst_41 : f32 to vector<8x1xf32>
    %70 = arith.addf %68, %69 : vector<8x1xf32>
    %71 = math.rsqrt %70 : vector<8x1xf32>
    %72 = vector.broadcast %71 : vector<8x1xf32> to vector<8x256xf32>
    %73 = arith.mulf %57, %72 : vector<8x256xf32>
    %74 = arith.mulf %64, %71 : vector<8x1xf32>
    %75 = vector.broadcast %74 : vector<8x1xf32> to vector<8x256xf32>
    %76 = arith.subf %73, %75 : vector<8x256xf32>
    %cst_42 = arith.constant 0.000000e+00 : f32
    %77 = vector.broadcast %cst_42 : f32 to vector<8x256xf32>
    %78 = arith.maximumf %76, %77 : vector<8x256xf32>
    %79 = vector.extract_strided_slice %56 {offsets = [0, 256], sizes = [8, 256], strides = [1, 1]} : vector<8x512xf32> to vector<8x256xf32>
    %cst_43 = arith.constant dense<0.000000e+00> : vector<8xf32>
    %80 = vector.multi_reduction <add>, %79, %cst_43 [1] : vector<8x256xf32> to vector<8xf32>
    %81 = vector.shape_cast %80 : vector<8xf32> to vector<8x1xf32>
    %82 = arith.mulf %79, %79 : vector<8x256xf32>
    %cst_44 = arith.constant dense<0.000000e+00> : vector<8xf32>
    %83 = vector.multi_reduction <add>, %82, %cst_44 [1] : vector<8x256xf32> to vector<8xf32>
    %84 = vector.shape_cast %83 : vector<8xf32> to vector<8x1xf32>
    %cst_45 = arith.constant 3.906250e-03 : f32
    %85 = vector.broadcast %cst_45 : f32 to vector<8x1xf32>
    %86 = arith.mulf %81, %85 : vector<8x1xf32>
    %cst_46 = arith.constant 3.906250e-03 : f32
    %87 = vector.broadcast %cst_46 : f32 to vector<8x1xf32>
    %88 = arith.mulf %84, %87 : vector<8x1xf32>
    %89 = arith.mulf %86, %86 : vector<8x1xf32>
    %90 = arith.subf %88, %89 : vector<8x1xf32>
    %cst_47 = arith.constant 9.99999974E-6 : f32
    %91 = vector.broadcast %cst_47 : f32 to vector<8x1xf32>
    %92 = arith.addf %90, %91 : vector<8x1xf32>
    %93 = math.rsqrt %92 : vector<8x1xf32>
    %94 = vector.broadcast %93 : vector<8x1xf32> to vector<8x256xf32>
    %95 = arith.mulf %79, %94 : vector<8x256xf32>
    %96 = arith.mulf %86, %93 : vector<8x1xf32>
    %97 = vector.broadcast %96 : vector<8x1xf32> to vector<8x256xf32>
    %98 = arith.subf %95, %97 : vector<8x256xf32>
    %cst_48 = arith.constant 0.000000e+00 : f32
    %99 = vector.broadcast %cst_48 : f32 to vector<8x256xf32>
    %100 = arith.maximumf %98, %99 : vector<8x256xf32>
    %101 = tpu.concatenate %78, %100 in 1 : vector<8x256xf32>, vector<8x256xf32> -> vector<8x512xf32>
    %c17_i32_49 = arith.constant 17 : i32
    %102 = tpu.dynamic_rotate %101 by %c17_i32_49 dim 1 : vector<8x512xf32>, i32 -> vector<8x512xf32>
    %c0_50 = arith.constant 0 : index
    %c0_51 = arith.constant 0 : index
    %c0_52 = arith.constant 0 : index
    %103 = vector.load %arg4[%c0_50, %c0_51, %c0_52] : memref<9x1x512xf32, #tpu.memory_space<vmem>>, vector<1x1x512xf32>
    %104 = vector.shape_cast %103 : vector<1x1x512xf32> to vector<1x512xf32>
    %105 = vector.broadcast %104 : vector<1x512xf32> to vector<8x512xf32>
    %106 = arith.mulf %102, %105 : vector<8x512xf32>
    %c0_53 = arith.constant 0 : index
    %c0_54 = arith.constant 0 : index
    %107 = vector.load %arg7[%c0_53, %c0_54] : memref<72x512xf32, #tpu.memory_space<vmem>>, vector<8x512xf32>
    tpu.vector_store %arg7[%c0_53, %c0_54], %106 {strides = array<i32>} : memref<72x512xf32, #tpu.memory_space<vmem>>, vector<8x512xf32>,
    %c16_i32_55 = arith.constant 16 : i32
    %108 = tpu.dynamic_rotate %101 by %c16_i32_55 dim 1 : vector<8x512xf32>, i32 -> vector<8x512xf32>
    %c1_56 = arith.constant 1 : index
    %c0_57 = arith.constant 0 : index
    %c0_58 = arith.constant 0 : index
    %109 = vector.load %arg4[%c1_56, %c0_57, %c0_58] : memref<9x1x512xf32, #tpu.memory_space<vmem>>, vector<1x1x512xf32>
    %110 = vector.shape_cast %109 : vector<1x1x512xf32> to vector<1x512xf32>
    %111 = vector.broadcast %110 : vector<1x512xf32> to vector<8x512xf32>
    %112 = arith.mulf %108, %111 : vector<8x512xf32>
    %c8_59 = arith.constant 8 : index
    %c0_60 = arith.constant 0 : index
    %113 = vector.load %arg7[%c8_59, %c0_60] : memref<72x512xf32, #tpu.memory_space<vmem>>, vector<8x512xf32>
    tpu.vector_store %arg7[%c8_59, %c0_60], %112 {strides = array<i32>} : memref<72x512xf32, #tpu.memory_space<vmem>>, vector<8x512xf32>,
    %c15_i32_61 = arith.constant 15 : i32
    %114 = tpu.dynamic_rotate %101 by %c15_i32_61 dim 1 : vector<8x512xf32>, i32 -> vector<8x512xf32>
    %c2_62 = arith.constant 2 : index
    %c0_63 = arith.constant 0 : index
    %c0_64 = arith.constant 0 : index
    %115 = vector.load %arg4[%c2_62, %c0_63, %c0_64] : memref<9x1x512xf32, #tpu.memory_space<vmem>>, vector<1x1x512xf32>
    %116 = vector.shape_cast %115 : vector<1x1x512xf32> to vector<1x512xf32>
    %117 = vector.broadcast %116 : vector<1x512xf32> to vector<8x512xf32>
    %118 = arith.mulf %114, %117 : vector<8x512xf32>
    %c16_65 = arith.constant 16 : index
    %c0_66 = arith.constant 0 : index
    %119 = vector.load %arg7[%c16_65, %c0_66] : memref<72x512xf32, #tpu.memory_space<vmem>>, vector<8x512xf32>
    tpu.vector_store %arg7[%c16_65, %c0_66], %118 {strides = array<i32>} : memref<72x512xf32, #tpu.memory_space<vmem>>, vector<8x512xf32>,
    %c1_i32_67 = arith.constant 1 : i32
    %120 = tpu.dynamic_rotate %101 by %c1_i32_67 dim 1 : vector<8x512xf32>, i32 -> vector<8x512xf32>
    %c3_68 = arith.constant 3 : index
    %c0_69 = arith.constant 0 : index
    %c0_70 = arith.constant 0 : index
    %121 = vector.load %arg4[%c3_68, %c0_69, %c0_70] : memref<9x1x512xf32, #tpu.memory_space<vmem>>, vector<1x1x512xf32>
    %122 = vector.shape_cast %121 : vector<1x1x512xf32> to vector<1x512xf32>
    %123 = vector.broadcast %122 : vector<1x512xf32> to vector<8x512xf32>
    %124 = arith.mulf %120, %123 : vector<8x512xf32>
    %c24_71 = arith.constant 24 : index
    %c0_72 = arith.constant 0 : index
    %125 = vector.load %arg7[%c24_71, %c0_72] : memref<72x512xf32, #tpu.memory_space<vmem>>, vector<8x512xf32>
    tpu.vector_store %arg7[%c24_71, %c0_72], %124 {strides = array<i32>} : memref<72x512xf32, #tpu.memory_space<vmem>>, vector<8x512xf32>,
    %c32_73 = arith.constant 32 : index
    %c0_74 = arith.constant 0 : index
    %126 = vector.load %arg7[%c32_73, %c0_74] : memref<72x512xf32, #tpu.memory_space<vmem>>, vector<8x512xf32>
    tpu.vector_store %arg7[%c32_73, %c0_74], %101 {strides = array<i32>} : memref<72x512xf32, #tpu.memory_space<vmem>>, vector<8x512xf32>,
    %c511_i32_75 = arith.constant 511 : i32
    %127 = tpu.dynamic_rotate %101 by %c511_i32_75 dim 1 : vector<8x512xf32>, i32 -> vector<8x512xf32>
    %c5_76 = arith.constant 5 : index
    %c0_77 = arith.constant 0 : index
    %c0_78 = arith.constant 0 : index
    %128 = vector.load %arg4[%c5_76, %c0_77, %c0_78] : memref<9x1x512xf32, #tpu.memory_space<vmem>>, vector<1x1x512xf32>
    %129 = vector.shape_cast %128 : vector<1x1x512xf32> to vector<1x512xf32>
    %130 = vector.broadcast %129 : vector<1x512xf32> to vector<8x512xf32>
    %131 = arith.mulf %127, %130 : vector<8x512xf32>
    %c40 = arith.constant 40 : index
    %c0_79 = arith.constant 0 : index
    %132 = vector.load %arg7[%c40, %c0_79] : memref<72x512xf32, #tpu.memory_space<vmem>>, vector<8x512xf32>
    tpu.vector_store %arg7[%c40, %c0_79], %131 {strides = array<i32>} : memref<72x512xf32, #tpu.memory_space<vmem>>, vector<8x512xf32>,
    %c497_i32_80 = arith.constant 497 : i32
    %133 = tpu.dynamic_rotate %101 by %c497_i32_80 dim 1 : vector<8x512xf32>, i32 -> vector<8x512xf32>
    %c6_81 = arith.constant 6 : index
    %c0_82 = arith.constant 0 : index
    %c0_83 = arith.constant 0 : index
    %134 = vector.load %arg4[%c6_81, %c0_82, %c0_83] : memref<9x1x512xf32, #tpu.memory_space<vmem>>, vector<1x1x512xf32>
    %135 = vector.shape_cast %134 : vector<1x1x512xf32> to vector<1x512xf32>
    %136 = vector.broadcast %135 : vector<1x512xf32> to vector<8x512xf32>
    %137 = arith.mulf %133, %136 : vector<8x512xf32>
    %c48 = arith.constant 48 : index
    %c0_84 = arith.constant 0 : index
    %138 = vector.load %arg7[%c48, %c0_84] : memref<72x512xf32, #tpu.memory_space<vmem>>, vector<8x512xf32>
    tpu.vector_store %arg7[%c48, %c0_84], %137 {strides = array<i32>} : memref<72x512xf32, #tpu.memory_space<vmem>>, vector<8x512xf32>,
    %c496_i32_85 = arith.constant 496 : i32
    %139 = tpu.dynamic_rotate %101 by %c496_i32_85 dim 1 : vector<8x512xf32>, i32 -> vector<8x512xf32>
    %c7_86 = arith.constant 7 : index
    %c0_87 = arith.constant 0 : index
    %c0_88 = arith.constant 0 : index
    %140 = vector.load %arg4[%c7_86, %c0_87, %c0_88] : memref<9x1x512xf32, #tpu.memory_space<vmem>>, vector<1x1x512xf32>
    %141 = vector.shape_cast %140 : vector<1x1x512xf32> to vector<1x512xf32>
    %142 = vector.broadcast %141 : vector<1x512xf32> to vector<8x512xf32>
    %143 = arith.mulf %139, %142 : vector<8x512xf32>
    %c56 = arith.constant 56 : index
    %c0_89 = arith.constant 0 : index
    %144 = vector.load %arg7[%c56, %c0_89] : memref<72x512xf32, #tpu.memory_space<vmem>>, vector<8x512xf32>
    tpu.vector_store %arg7[%c56, %c0_89], %143 {strides = array<i32>} : memref<72x512xf32, #tpu.memory_space<vmem>>, vector<8x512xf32>,
    %c495_i32_90 = arith.constant 495 : i32
    %145 = tpu.dynamic_rotate %101 by %c495_i32_90 dim 1 : vector<8x512xf32>, i32 -> vector<8x512xf32>
    %c8_91 = arith.constant 8 : index
    %c0_92 = arith.constant 0 : index
    %c0_93 = arith.constant 0 : index
    %146 = vector.load %arg4[%c8_91, %c0_92, %c0_93] : memref<9x1x512xf32, #tpu.memory_space<vmem>>, vector<1x1x512xf32>
    %147 = vector.shape_cast %146 : vector<1x1x512xf32> to vector<1x512xf32>
    %148 = vector.broadcast %147 : vector<1x512xf32> to vector<8x512xf32>
    %149 = arith.mulf %145, %148 : vector<8x512xf32>
    %c64 = arith.constant 64 : index
    %c0_94 = arith.constant 0 : index
    %150 = vector.load %arg7[%c64, %c0_94] : memref<72x512xf32, #tpu.memory_space<vmem>>, vector<8x512xf32>
    tpu.vector_store %arg7[%c64, %c0_94], %149 {strides = array<i32>} : memref<72x512xf32, #tpu.memory_space<vmem>>, vector<8x512xf32>,
    %c0_95 = arith.constant 0 : index
    %c0_96 = arith.constant 0 : index
    %151 = vector.load %arg3[%c0_95, %c0_96] : memref<4x72xf32, #tpu.memory_space<vmem>>, vector<4x72xf32>
    %c0_97 = arith.constant 0 : index
    %c0_98 = arith.constant 0 : index
    %152 = vector.load %arg7[%c0_97, %c0_98] : memref<72x512xf32, #tpu.memory_space<vmem>>, vector<72x512xf32>
    %cst_99 = arith.constant dense<0.000000e+00> : vector<4x512xf32>
    %153 = tpu.matmul %151, %152, %cst_99 {dimension_numbers = #tpu.dot_dimension_numbers<[1], [0], [0], [1], [0, 0, 1, 1], [], []>} : vector<4x72xf32>, vector<72x512xf32>, vector<4x512xf32> -> vector<4x512xf32>
    %154 = vector.extract_strided_slice %153 {offsets = [0, 0], sizes = [4, 256], strides = [1, 1]} : vector<4x512xf32> to vector<4x256xf32>
    %cst_100 = arith.constant dense<0.000000e+00> : vector<4xf32>
    %155 = vector.multi_reduction <add>, %154, %cst_100 [1] : vector<4x256xf32> to vector<4xf32>
    %156 = vector.shape_cast %155 : vector<4xf32> to vector<4x1xf32>
    %157 = arith.mulf %154, %154 : vector<4x256xf32>
    %cst_101 = arith.constant dense<0.000000e+00> : vector<4xf32>
    %158 = vector.multi_reduction <add>, %157, %cst_101 [1] : vector<4x256xf32> to vector<4xf32>
    %159 = vector.shape_cast %158 : vector<4xf32> to vector<4x1xf32>
    %cst_102 = arith.constant 3.906250e-03 : f32
    %160 = vector.broadcast %cst_102 : f32 to vector<4x1xf32>
    %161 = arith.mulf %156, %160 : vector<4x1xf32>
    %cst_103 = arith.constant 3.906250e-03 : f32
    %162 = vector.broadcast %cst_103 : f32 to vector<4x1xf32>
    %163 = arith.mulf %159, %162 : vector<4x1xf32>
    %164 = arith.mulf %161, %161 : vector<4x1xf32>
    %165 = arith.subf %163, %164 : vector<4x1xf32>
    %cst_104 = arith.constant 9.99999974E-6 : f32
    %166 = vector.broadcast %cst_104 : f32 to vector<4x1xf32>
    %167 = arith.addf %165, %166 : vector<4x1xf32>
    %168 = math.rsqrt %167 : vector<4x1xf32>
    %169 = vector.broadcast %168 : vector<4x1xf32> to vector<4x256xf32>
    %170 = arith.mulf %154, %169 : vector<4x256xf32>
    %171 = arith.mulf %161, %168 : vector<4x1xf32>
    %172 = vector.broadcast %171 : vector<4x1xf32> to vector<4x256xf32>
    %173 = arith.subf %170, %172 : vector<4x256xf32>
    %cst_105 = arith.constant 0.000000e+00 : f32
    %174 = vector.broadcast %cst_105 : f32 to vector<4x256xf32>
    %175 = arith.maximumf %173, %174 : vector<4x256xf32>
    %176 = vector.extract_strided_slice %153 {offsets = [0, 256], sizes = [4, 256], strides = [1, 1]} : vector<4x512xf32> to vector<4x256xf32>
    %cst_106 = arith.constant dense<0.000000e+00> : vector<4xf32>
    %177 = vector.multi_reduction <add>, %176, %cst_106 [1] : vector<4x256xf32> to vector<4xf32>
    %178 = vector.shape_cast %177 : vector<4xf32> to vector<4x1xf32>
    %179 = arith.mulf %176, %176 : vector<4x256xf32>
    %cst_107 = arith.constant dense<0.000000e+00> : vector<4xf32>
    %180 = vector.multi_reduction <add>, %179, %cst_107 [1] : vector<4x256xf32> to vector<4xf32>
    %181 = vector.shape_cast %180 : vector<4xf32> to vector<4x1xf32>
    %cst_108 = arith.constant 3.906250e-03 : f32
    %182 = vector.broadcast %cst_108 : f32 to vector<4x1xf32>
    %183 = arith.mulf %178, %182 : vector<4x1xf32>
    %cst_109 = arith.constant 3.906250e-03 : f32
    %184 = vector.broadcast %cst_109 : f32 to vector<4x1xf32>
    %185 = arith.mulf %181, %184 : vector<4x1xf32>
    %186 = arith.mulf %183, %183 : vector<4x1xf32>
    %187 = arith.subf %185, %186 : vector<4x1xf32>
    %cst_110 = arith.constant 9.99999974E-6 : f32
    %188 = vector.broadcast %cst_110 : f32 to vector<4x1xf32>
    %189 = arith.addf %187, %188 : vector<4x1xf32>
    %190 = math.rsqrt %189 : vector<4x1xf32>
    %191 = vector.broadcast %190 : vector<4x1xf32> to vector<4x256xf32>
    %192 = arith.mulf %176, %191 : vector<4x256xf32>
    %193 = arith.mulf %183, %190 : vector<4x1xf32>
    %194 = vector.broadcast %193 : vector<4x1xf32> to vector<4x256xf32>
    %195 = arith.subf %192, %194 : vector<4x256xf32>
    %cst_111 = arith.constant 0.000000e+00 : f32
    %196 = vector.broadcast %cst_111 : f32 to vector<4x256xf32>
    %197 = arith.maximumf %195, %196 : vector<4x256xf32>
    %198 = tpu.concatenate %175, %197 in 1 : vector<4x256xf32>, vector<4x256xf32> -> vector<4x512xf32>
    %199 = vector.extract_strided_slice %198 {offsets = [0, 0], sizes = [4, 256], strides = [1, 1]} : vector<4x512xf32> to vector<4x256xf32>
    %c0_112 = arith.constant 0 : index
    %c0_113 = arith.constant 0 : index
    %c0_114 = arith.constant 0 : index
    %200 = vector.load %arg5[%c0_112, %c0_113, %c0_114] : memref<2x4x256xf32, #tpu.memory_space<vmem>>, vector<1x4x256xf32>
    %201 = vector.shape_cast %200 : vector<1x4x256xf32> to vector<4x256xf32>
    %202 = vector.shape_cast %199 : vector<4x256xf32> to vector<1x4x256xf32>
    tpu.vector_store %arg5[%c0_112, %c0_113, %c0_114], %202 {strides = array<i32>} : memref<2x4x256xf32, #tpu.memory_space<vmem>>, vector<1x4x256xf32>,
    %203 = vector.extract_strided_slice %198 {offsets = [0, 256], sizes = [4, 256], strides = [1, 1]} : vector<4x512xf32> to vector<4x256xf32>
    %c1_115 = arith.constant 1 : index
    %c0_116 = arith.constant 0 : index
    %c0_117 = arith.constant 0 : index
    %204 = vector.load %arg5[%c1_115, %c0_116, %c0_117] : memref<2x4x256xf32, #tpu.memory_space<vmem>>, vector<1x4x256xf32>
    %205 = vector.shape_cast %204 : vector<1x4x256xf32> to vector<4x256xf32>
    %206 = vector.shape_cast %203 : vector<4x256xf32> to vector<1x4x256xf32>
    tpu.vector_store %arg5[%c1_115, %c0_116, %c0_117], %206 {strides = array<i32>} : memref<2x4x256xf32, #tpu.memory_space<vmem>>, vector<1x4x256xf32>,
    return
  }
  func.func @transform_0(%arg0: i32) -> (i32, i32, i32) {
    %c0_i32 = arith.constant 0 : i32
    %c0_i32_0 = arith.constant 0 : i32
    %c0_i32_1 = arith.constant 0 : i32
    return %arg0, %c0_i32, %c0_i32_0 : i32, i32, i32
  }
  func.func @transform_1(%arg0: i32) -> (i32, i32) {
    %c0_i32 = arith.constant 0 : i32
    %c0_i32_0 = arith.constant 0 : i32
    %c0_i32_1 = arith.constant 0 : i32
    return %c0_i32, %c0_i32_0 : i32, i32
  }
  func.func @transform_2(%arg0: i32) -> (i32, i32) {
    %c0_i32 = arith.constant 0 : i32
    %c0_i32_0 = arith.constant 0 : i32
    %c0_i32_1 = arith.constant 0 : i32
    return %c0_i32, %c0_i32_0 : i32, i32
  }
  func.func @transform_3(%arg0: i32) -> (i32, i32, i32) {
    %c0_i32 = arith.constant 0 : i32
    %c0_i32_0 = arith.constant 0 : i32
    %c0_i32_1 = arith.constant 0 : i32
    %c0_i32_2 = arith.constant 0 : i32
    return %c0_i32, %c0_i32_0, %c0_i32_1 : i32, i32, i32
  }
  func.func @transform_4(%arg0: i32) -> (i32, i32, i32) {
    %c0_i32 = arith.constant 0 : i32
    %c0_i32_0 = arith.constant 0 : i32
    %c0_i32_1 = arith.constant 0 : i32
    return %arg0, %c0_i32, %c0_i32_0 : i32, i32, i32
  }
}

</mosaic_0001>

<llo_original>
// kernel: con_block_2d.1
$region0: #{con_block_2d.1}
  #allocation0 [shape = 'u32[]', space=smem, size = 0x4, offset = 0x4, fixed_abs, tag = 'smem constant byte address 0x4 - core index']
  #allocation1 [shape = 'u32[144,128]{1,0:T(1,128)}', space=vmem, size = 0x12000, scoped, tag = 'internal scratch']
  #allocation2 [shape = 'f32[36,512]{1,0:T(8,128)}', space=vmem, size = 0x14000, scoped, tag = 'scratch operand']
  #allocation3 [shape = 'f32[72,512]{1,0:T(8,128)}', space=vmem, size = 0x24000, scoped, tag = 'scratch operand']
  %s0 = inlined_call_operand.vmem [shape: f32[4,4,256], index: 0, kind: input, shape index: {}]
  %s1 = inlined_call_operand.vmem [shape: f32[8,36], index: 1, kind: input, shape index: {}]
  %s2 = inlined_call_operand.vmem [shape: f32[4,72], index: 2, kind: input, shape index: {}]
  %s3 = inlined_call_operand.vmem [shape: f32[9,1,512], index: 3, kind: input, shape index: {}]
  %s4 = inlined_call_operand.vmem [shape: f32[4,4,256], index: 4, kind: output, shape index: {}]
  %s5 = sld [smem:[#allocation0]]
  $region49: #{con_block_2d.1} parent=0
    _
  %s7 = ssub.s32 1, %s5
  %s8 = scalar_select 0, %s7, %s5
  loop: start=0, step=1, limit=4
  $region2: #{con_block_2d.1} parent=0 // loop_pre_header
    _
  $region3: #{con_block_2d.1} parent=0 // loop_header
    %s10 = sphi 0, %s14
    %p11 = scmp.ge.s32.totalorder %s10, 4
    %s20 = sphi 0, %s22
    %s23 = sphi 0, %s20
    %s24 = sphi 0, %s23
    %s40 = sphi 0, %s24
    %s44 = sphi 0, %s44
    %s46 = sphi 0, %s44
    %s47 = sphi 0, %s46
    %s61 = sphi 0, %s47
    %s65 = sphi 0, %s65
    %s67 = sphi 0, %s65
    %s68 = sphi 0, %s67
    %s82 = sphi 0, %s68
    %s86 = sphi 0, %s86
    %s88 = sphi 0, %s86
    %s89 = sphi 0, %s88
    %s103 = sphi 0, %s89
    %s109 = sphi 0, %s111
    %s112 = sphi 0, %s109
    %s113 = sphi 0, %s112
    %s129 = sphi 0, %s113
  $region4: #{con_block_2d.1} parent=0 // loop_header_branch
    %13 = sbr.rel (%p11) target = $region8
  $region5: #{con_block_2d.1} parent=0 // loop_body
    %s15 = ssub.s32 %s10, 1
    %s16 = ssub.s32 %s10, 2
    %s17 = sadd.s32 %s10, 1
    %s18 = ssub.s32 %s10, %s17
    %p19 = scmp.eq.s32.totalorder %s18, 0
    %s21 = sadd.s32 %s20, 1
    %s22 = scalar_select %p19, %s20, %s21
    %p25 = pneg %p19
    %p26 = scmp.eq.s32.totalorder %s10, 1
    %p27 = por %p25, %p26
    %p28 = scmp.ne.s32.totalorder %s20, %s23
    %p29 = scmp.eq.s32.totalorder %s10, 0
    %p30 = por %p28, %p29
    %p31 = scmp.ne.s32.totalorder %s20, %s23
    %p32 = scmp.eq.s32.totalorder %s15, 1
    %p33 = por %p31, %p32
    %p34 = scmp.ne.s32.totalorder %s23, %s24
    %p35 = scmp.eq.s32.totalorder %s15, 0
    %p36 = por %p34, %p35
    %p37 = scmp.ne.s32.totalorder %s23, %s24
    %p38 = scmp.eq.s32.totalorder %s16, 1
    %p39 = por %p37, %p38
    %p41 = scmp.ne.s32.totalorder %s24, %s40
    %p42 = scmp.eq.s32.totalorder %s16, 0
    %p43 = por %p41, %p42
    %s45 = sadd.s32 %s44, 1
    %p48 = scmp.eq.s32.totalorder %s10, 1
    %p49 = scmp.ne.s32.totalorder %s44, %s46
    %p50 = scmp.eq.s32.totalorder %s10, 0
    %p51 = por %p49, %p50
    %p52 = scmp.ne.s32.totalorder %s44, %s46
    %p53 = scmp.eq.s32.totalorder %s15, 1
    %p54 = por %p52, %p53
    %p55 = scmp.ne.s32.totalorder %s46, %s47
    %p56 = scmp.eq.s32.totalorder %s15, 0
    %p57 = por %p55, %p56
    %p58 = scmp.ne.s32.totalorder %s46, %s47
    %p59 = scmp.eq.s32.totalorder %s16, 1
    %p60 = por %p58, %p59
    %p62 = scmp.ne.s32.totalorder %s47, %s61
    %p63 = scmp.eq.s32.totalorder %s16, 0
    %p64 = por %p62, %p63
    %s66 = sadd.s32 %s65, 1
    %p69 = scmp.eq.s32.totalorder %s10, 1
    %p70 = scmp.ne.s32.totalorder %s65, %s67
    %p71 = scmp.eq.s32.totalorder %s10, 0
    %p72 = por %p70, %p71
    %p73 = scmp.ne.s32.totalorder %s65, %s67
    %p74 = scmp.eq.s32.totalorder %s15, 1
    %p75 = por %p73, %p74
    %p76 = scmp.ne.s32.totalorder %s67, %s68
    %p77 = scmp.eq.s32.totalorder %s15, 0
    %p78 = por %p76, %p77
    %p79 = scmp.ne.s32.totalorder %s67, %s68
    %p80 = scmp.eq.s32.totalorder %s16, 1
    %p81 = por %p79, %p80
    %p83 = scmp.ne.s32.totalorder %s68, %s82
    %p84 = scmp.eq.s32.totalorder %s16, 0
    %p85 = por %p83, %p84
    %s87 = sadd.s32 %s86, 1
    %p90 = scmp.eq.s32.totalorder %s10, 1
    %p91 = scmp.ne.s32.totalorder %s86, %s88
    %p92 = scmp.eq.s32.totalorder %s10, 0
    %p93 = por %p91, %p92
    %p94 = scmp.ne.s32.totalorder %s86, %s88
    %p95 = scmp.eq.s32.totalorder %s15, 1
    %p96 = por %p94, %p95
    %p97 = scmp.ne.s32.totalorder %s88, %s89
    %p98 = scmp.eq.s32.totalorder %s15, 0
    %p99 = por %p97, %p98
    %p100 = scmp.ne.s32.totalorder %s88, %s89
    %p101 = scmp.eq.s32.totalorder %s16, 1
    %p102 = por %p100, %p101
    %p104 = scmp.ne.s32.totalorder %s89, %s103
    %p105 = scmp.eq.s32.totalorder %s16, 0
    %p106 = por %p104, %p105
    %s107 = ssub.s32 %s10, %s17
    %p108 = scmp.eq.s32.totalorder %s107, 0
    %s110 = sadd.s32 %s109, 1
    %s111 = scalar_select %p108, %s109, %s110
    %p114 = pneg %p108
    %p115 = scmp.eq.s32.totalorder %s10, 1
    %p116 = por %p114, %p115
    %p117 = scmp.ne.s32.totalorder %s109, %s112
    %p118 = scmp.eq.s32.totalorder %s10, 0
    %p119 = por %p117, %p118
    %p120 = scmp.ne.s32.totalorder %s109, %s112
    %p121 = scmp.eq.s32.totalorder %s15, 1
    %p122 = por %p120, %p121
    %p123 = scmp.ne.s32.totalorder %s112, %s113
    %p124 = scmp.eq.s32.totalorder %s15, 0
    %p125 = por %p123, %p124
    %p126 = scmp.ne.s32.totalorder %s112, %s113
    %p127 = scmp.eq.s32.totalorder %s16, 1
    %p128 = por %p126, %p127
    %p130 = scmp.ne.s32.totalorder %s113, %s129
    %p131 = scmp.eq.s32.totalorder %s16, 0
    %p132 = por %p130, %p131
    %p133 = scmp.le.s32.totalorder 1, %s10
    %p134 = scmp.lt.s32.totalorder %s10, 3
    %p135 = pnand %p133, %p134
    %p136 = pneg %p135
    // Predicated region
    $region9: #{con_block_2d.1} parent=5 // pred_check
      _
    $region10: #{con_block_2d.1} parent=5 // pred_check_branch
      %138 = sbr.rel (%p135) target = $region12
    $region11: #{con_block_2d.1} parent=5 // pred_region
      %s139 = ssub.s32 %s10, 1
      // Predicated region
      $region13: #{con_block_2d.1} parent=11 // pred_check
        %p140 = pneg %p57
      $region14: #{con_block_2d.1} parent=11 // pred_check_branch
        %142 = sbr.rel (%p140) target = $region16
      $region15: #{con_block_2d.1} parent=11 // pred_region
        _
      $region16: #{con_block_2d.1} parent=11 // pred_fallthru
        _
      // Predicated region
      $region17: #{con_block_2d.1} parent=11 // pred_check
        %p143 = pneg %p78
      $region18: #{con_block_2d.1} parent=11 // pred_check_branch
        %145 = sbr.rel (%p143) target = $region20
      $region19: #{con_block_2d.1} parent=11 // pred_region
        _
      $region20: #{con_block_2d.1} parent=11 // pred_fallthru
        _
      // Predicated region
      $region21: #{con_block_2d.1} parent=11 // pred_check
        %p146 = pneg %p99
      $region22: #{con_block_2d.1} parent=11 // pred_check_branch
        %148 = sbr.rel (%p146) target = $region24
      $region23: #{con_block_2d.1} parent=11 // pred_region
        _
      $region24: #{con_block_2d.1} parent=11 // pred_fallthru
        _
    $region12: #{con_block_2d.1} parent=5 // pred_fallthru
      _
    %p149 = scmp.lt.s32.totalorder %s10, 2
    // Predicated region
    $region25: #{con_block_2d.1} parent=5 // pred_check
      %p150 = pneg %p149
    $region26: #{con_block_2d.1} parent=5 // pred_check_branch
      %152 = sbr.rel (%p150) target = $region28
    $region27: #{con_block_2d.1} parent=5 // pred_region
      // Predicated region
      $region29: #{con_block_2d.1} parent=27 // pred_check
        %p153 = pneg %p30
      $region30: #{con_block_2d.1} parent=27 // pred_check_branch
        %155 = sbr.rel (%p153) target = $region32
      $region31: #{con_block_2d.1} parent=27 // pred_region
        %s156 = smul.u32 2, %s10
        %p157 = scmp.lt.s32.totalorder %s156, 3
        %s158 = scalar_select %p157, %s156, 3
        %s159 = smul.addr %s158, 2
        %s160 = smul.addr %s159, 4
        %s161 = scalar_lea.vmem %s0, %s160
        %s162 = smul.u32 2, %s10
      $region32: #{con_block_2d.1} parent=27 // pred_fallthru
        _
    $region28: #{con_block_2d.1} parent=5 // pred_fallthru
      _
    %p163 = scmp.le.s32.totalorder 1, %s10
    %p164 = scmp.lt.s32.totalorder %s10, 3
    %p165 = pnand %p163, %p164
    %p166 = pneg %p165
    // Predicated region
    $region33: #{con_block_2d.1} parent=5 // pred_check
      _
    $region34: #{con_block_2d.1} parent=5 // pred_check_branch
      %168 = sbr.rel (%p165) target = $region36
    $region35: #{con_block_2d.1} parent=5 // pred_region
      %s169 = ssub.s32 %s10, 1
      %s170 = smul.u32 2, %s15
      %p171 = scmp.lt.s32.totalorder %s170, 3
      %s172 = scalar_select %p171, %s170, 3
      %s173 = smul.addr %s172, 2
      %s174 = smul.addr %s173, 4
      %s175 = scalar_lea.vmem %s0, %s174
      %p176 = pneg %p36
      %p177 = pneg %p33
      %p178 = pneg %p57
      %p179 = pneg %p54
      %p180 = pneg %p78
      %p181 = pneg %p75
      %p182 = pneg %p99
      %p183 = pneg %p96
      %p184 = pneg %p125
      %p185 = pneg %p122
      %s186 = smul.u32 2, %s15
      %p187 = scmp.lt.s32.totalorder %s186, 3
      %s188 = scalar_select %p187, %s186, 3
      %s189 = smul.addr %s188, 2
      %s190 = smul.addr %s189, 4
      %s191 = scalar_lea.vmem %s4, %s190
      %s192 = smul.u32 2, %s15
      %p193 = scmp.lt.s32.totalorder %s192, 3
      %s194 = scalar_select %p193, %s192, 3
      %s195 = smul.addr %s194, 2
      %s196 = smul.addr %s195, 4
      %s197 = scalar_lea.vmem %s0, %s196
      %s198 = smul.u32 2, %s15
      %s199 = smul.u32 2, %s15
      %p200 = scmp.lt.s32.totalorder %s199, 3
      %s201 = scalar_select %p200, %s199, 3
      %s202 = smul.addr %s201, 2
      %s203 = smul.addr %s202, 4
      %s204 = scalar_lea.vmem %s4, %s203
      %s205 = smul.u32 2, %s15
      %v206 = vld [vmem:[%s197] sm:$0xff]
      %s207 = scalar_lea.vmem %s197, 8
      %v208 = vld [vmem:[%s207] sm:$0xff]
      %v210 = vcombine.high %v206, %v206
      %v213 = vcombine.high %v208, %v208
      %215 = vrot.lane.b32.xlu0 %v206, 17
      %v216 = vpop.permute.xlu0 %215
      %217 = vrot.lane.b32.xlu0 %v210, 17
      %v218 = vpop.permute.xlu0 %217
      %219 = vrot.lane.b32.xlu0 %v208, 17
      %v220 = vpop.permute.xlu0 %219
      %221 = vrot.lane.b32.xlu0 %v213, 17
      %v222 = vpop.permute.xlu0 %221
      %v223 = vlaneseq
      %v224 = vand.u32 %v223, 127
      %vm225 = vcmp.lt.s32.totalorder %v224, 17
      %v226 = vsel %vm225, %v220, %v222
      %v227 = vsel %vm225, %v218, %v220
      %v228 = vsel %vm225, %v216, %v218
      %v229 = vsel %vm225, %v222, %v216
      %v230 = vld [vmem:[%s3] sm:$0xf]
      %v232 = vlaneseq
      %v233 = vshrl.u32 %v232, 7
      %v234 = vsub.s32 0, %v233
      %v235 = vrot.slane %v230, %v234
      %v236 = vlaneseq
      %v237 = vshrl.u32 %v236, 7
      %v238 = vsub.s32 1, %v237
      %v239 = vrot.slane %v230, %v238
      %v240 = vlaneseq
      %v241 = vshrl.u32 %v240, 7
      %v242 = vsub.s32 2, %v241
      %v243 = vrot.slane %v230, %v242
      %v244 = vlaneseq
      %v245 = vshrl.u32 %v244, 7
      %v246 = vsub.s32 3, %v245
      %v247 = vrot.slane %v230, %v246
      %v252 = vmul.f32 %v229, %v235
      %v253 = vmul.f32 %v228, %v239
      %v254 = vmul.f32 %v227, %v243
      %v255 = vmul.f32 %v226, %v247
      %256 = vst [vmem:[#allocation2] sm:$0xf] %v252
      %257 = vst [vmem:[#allocation2 + $0x8] sm:$0xf] %v253
      %258 = vst [vmem:[#allocation2 + $0x10] sm:$0xf] %v254
      %259 = vst [vmem:[#allocation2 + $0x18] sm:$0xf] %v255
      %260 = vrot.lane.b32.xlu0 %v206, 16
      %v261 = vpop.permute.xlu0 %260
      %262 = vrot.lane.b32.xlu0 %v210, 16
      %v263 = vpop.permute.xlu0 %262
      %264 = vrot.lane.b32.xlu0 %v208, 16
      %v265 = vpop.permute.xlu0 %264
      %266 = vrot.lane.b32.xlu0 %v213, 16
      %v267 = vpop.permute.xlu0 %266
      %vm268 = vcmp.lt.s32.totalorder %v224, 16
      %v269 = vsel %vm268, %v265, %v267
      %v270 = vsel %vm268, %v263, %v265
      %v271 = vsel %vm268, %v261, %v263
      %v272 = vsel %vm268, %v267, %v261
      %s273 = scalar_lea.vmem %s3, 4
      %v274 = vld [vmem:[%s273] sm:$0xf]
      %v276 = vlaneseq
      %v277 = vshrl.u32 %v276, 7
      %v278 = vsub.s32 0, %v277
      %v279 = vrot.slane %v274, %v278
      %v280 = vlaneseq
      %v281 = vshrl.u32 %v280, 7
      %v282 = vsub.s32 1, %v281
      %v283 = vrot.slane %v274, %v282
      %v284 = vlaneseq
      %v285 = vshrl.u32 %v284, 7
      %v286 = vsub.s32 2, %v285
      %v287 = vrot.slane %v274, %v286
      %v288 = vlaneseq
      %v289 = vshrl.u32 %v288, 7
      %v290 = vsub.s32 3, %v289
      %v291 = vrot.slane %v274, %v290
      %v296 = vmul.f32 %v272, %v279
      %v297 = vmul.f32 %v271, %v283
      %v298 = vmul.f32 %v270, %v287
      %v299 = vmul.f32 %v269, %v291
      %v304 = vrot.slane %v296, 4
      %v305 = vrot.slane %v297, 4
      %v306 = vrot.slane %v298, 4
      %v307 = vrot.slane %v299, 4
      %312 = vst [vmem:[#allocation2] sm:$0xf0] %v304
      %313 = vst [vmem:[#allocation2 + $0x8] sm:$0xf0] %v305
      %314 = vst [vmem:[#allocation2 + $0x10] sm:$0xf0] %v306
      %315 = vst [vmem:[#allocation2 + $0x18] sm:$0xf0] %v307
      %316 = vrot.lane.b32.xlu0 %v206, 15
      %v317 = vpop.permute.xlu0 %316
      %318 = vrot.lane.b32.xlu0 %v210, 15
      %v319 = vpop.permute.xlu0 %318
      %320 = vrot.lane.b32.xlu0 %v208, 15
      %v321 = vpop.permute.xlu0 %320
      %322 = vrot.lane.b32.xlu0 %v213, 15
      %v323 = vpop.permute.xlu0 %322
      %vm324 = vcmp.lt.s32.totalorder %v224, 15
      %v325 = vsel %vm324, %v321, %v323
      %v326 = vsel %vm324, %v319, %v321
      %v327 = vsel %vm324, %v317, %v319
      %v328 = vsel %vm324, %v323, %v317
      %s329 = scalar_lea.vmem %s3, 8
      %v330 = vld [vmem:[%s329] sm:$0xf]
      %v332 = vlaneseq
      %v333 = vshrl.u32 %v332, 7
      %v334 = vsub.s32 0, %v333
      %v335 = vrot.slane %v330, %v334
      %v336 = vlaneseq
      %v337 = vshrl.u32 %v336, 7
      %v338 = vsub.s32 1, %v337
      %v339 = vrot.slane %v330, %v338
      %v340 = vlaneseq
      %v341 = vshrl.u32 %v340, 7
      %v342 = vsub.s32 2, %v341
      %v343 = vrot.slane %v330, %v342
      %v344 = vlaneseq
      %v345 = vshrl.u32 %v344, 7
      %v346 = vsub.s32 3, %v345
      %v347 = vrot.slane %v330, %v346
      %v352 = vmul.f32 %v328, %v335
      %v353 = vmul.f32 %v327, %v339
      %v354 = vmul.f32 %v326, %v343
      %v355 = vmul.f32 %v325, %v347
      %356 = vst [vmem:[#allocation2 + $0x20] sm:$0xf] %v352
      %357 = vst [vmem:[#allocation2 + $0x28] sm:$0xf] %v353
      %358 = vst [vmem:[#allocation2 + $0x30] sm:$0xf] %v354
      %359 = vst [vmem:[#allocation2 + $0x38] sm:$0xf] %v355
      %360 = vrot.lane.b32.xlu0 %v206, 1
      %v361 = vpop.permute.xlu0 %360
      %362 = vrot.lane.b32.xlu0 %v210, 1
      %v363 = vpop.permute.xlu0 %362
      %364 = vrot.lane.b32.xlu0 %v208, 1
      %v365 = vpop.permute.xlu0 %364
      %366 = vrot.lane.b32.xlu0 %v213, 1
      %v367 = vpop.permute.xlu0 %366
      %vm368 = vcmp.lt.s32.totalorder %v224, 1
      %v369 = vsel %vm368, %v365, %v367
      %v370 = vsel %vm368, %v363, %v365
      %v371 = vsel %vm368, %v361, %v363
      %v372 = vsel %vm368, %v367, %v361
      %s373 = scalar_lea.vmem %s3, 12
      %v374 = vld [vmem:[%s373] sm:$0xf]
      %v376 = vlaneseq
      %v377 = vshrl.u32 %v376, 7
      %v378 = vsub.s32 0, %v377
      %v379 = vrot.slane %v374, %v378
      %v380 = vlaneseq
      %v381 = vshrl.u32 %v380, 7
      %v382 = vsub.s32 1, %v381
      %v383 = vrot.slane %v374, %v382
      %v384 = vlaneseq
      %v385 = vshrl.u32 %v384, 7
      %v386 = vsub.s32 2, %v385
      %v387 = vrot.slane %v374, %v386
      %v388 = vlaneseq
      %v389 = vshrl.u32 %v388, 7
      %v390 = vsub.s32 3, %v389
      %v391 = vrot.slane %v374, %v390
      %v396 = vmul.f32 %v372, %v379
      %v397 = vmul.f32 %v371, %v383
      %v398 = vmul.f32 %v370, %v387
      %v399 = vmul.f32 %v369, %v391
      %v404 = vrot.slane %v396, 4
      %v405 = vrot.slane %v397, 4
      %v406 = vrot.slane %v398, 4
      %v407 = vrot.slane %v399, 4
      %412 = vst [vmem:[#allocation2 + $0x20] sm:$0xf0] %v404
      %413 = vst [vmem:[#allocation2 + $0x28] sm:$0xf0] %v405
      %414 = vst [vmem:[#allocation2 + $0x30] sm:$0xf0] %v406
      %415 = vst [vmem:[#allocation2 + $0x38] sm:$0xf0] %v407
      %416 = vst [vmem:[#allocation2 + $0x40] sm:$0xf] %v206
      %417 = vst [vmem:[#allocation2 + $0x48] sm:$0xf] %v210
      %418 = vst [vmem:[#allocation2 + $0x50] sm:$0xf] %v208
      %419 = vst [vmem:[#allocation2 + $0x58] sm:$0xf] %v213
      %420 = vrot.lane.b32.xlu0 %v206, 127
      %v421 = vpop.permute.xlu0 %420
      %422 = vrot.lane.b32.xlu0 %v210, 127
      %v423 = vpop.permute.xlu0 %422
      %424 = vrot.lane.b32.xlu0 %v208, 127
      %v425 = vpop.permute.xlu0 %424
      %426 = vrot.lane.b32.xlu0 %v213, 127
      %v427 = vpop.permute.xlu0 %426
      %vm428 = vcmp.lt.s32.totalorder %v224, 127
      %v429 = vsel %vm428, %v425, %v427
      %v430 = vsel %vm428, %v423, %v425
      %v431 = vsel %vm428, %v421, %v423
      %v432 = vsel %vm428, %v427, %v421
      %s433 = scalar_lea.vmem %s3, 20
      %v434 = vld [vmem:[%s433] sm:$0xf]
      %v436 = vlaneseq
      %v437 = vshrl.u32 %v436, 7
      %v438 = vsub.s32 0, %v437
      %v439 = vrot.slane %v434, %v438
      %v440 = vlaneseq
      %v441 = vshrl.u32 %v440, 7
      %v442 = vsub.s32 1, %v441
      %v443 = vrot.slane %v434, %v442
      %v444 = vlaneseq
      %v445 = vshrl.u32 %v444, 7
      %v446 = vsub.s32 2, %v445
      %v447 = vrot.slane %v434, %v446
      %v448 = vlaneseq
      %v449 = vshrl.u32 %v448, 7
      %v450 = vsub.s32 3, %v449
      %v451 = vrot.slane %v434, %v450
      %v456 = vmul.f32 %v431, %v439
      %v457 = vmul.f32 %v430, %v443
      %v458 = vmul.f32 %v429, %v447
      %v459 = vmul.f32 %v432, %v451
      %v464 = vrot.slane %v456, 4
      %v465 = vrot.slane %v457, 4
      %v466 = vrot.slane %v458, 4
      %v467 = vrot.slane %v459, 4
      %472 = vst [vmem:[#allocation2 + $0x40] sm:$0xf0] %v464
      %473 = vst [vmem:[#allocation2 + $0x48] sm:$0xf0] %v465
      %474 = vst [vmem:[#allocation2 + $0x50] sm:$0xf0] %v466
      %475 = vst [vmem:[#allocation2 + $0x58] sm:$0xf0] %v467
      %476 = vrot.lane.b32.xlu0 %v206, 113
      %v477 = vpop.permute.xlu0 %476
      %478 = vrot.lane.b32.xlu0 %v210, 113
      %v479 = vpop.permute.xlu0 %478
      %480 = vrot.lane.b32.xlu0 %v208, 113
      %v481 = vpop.permute.xlu0 %480
      %482 = vrot.lane.b32.xlu0 %v213, 113
      %v483 = vpop.permute.xlu0 %482
      %vm484 = vcmp.lt.s32.totalorder %v224, 113
      %v485 = vsel %vm484, %v481, %v483
      %v486 = vsel %vm484, %v479, %v481
      %v487 = vsel %vm484, %v477, %v479
      %v488 = vsel %vm484, %v483, %v477
      %s489 = scalar_lea.vmem %s3, 24
      %v490 = vld [vmem:[%s489] sm:$0xf]
      %v492 = vlaneseq
      %v493 = vshrl.u32 %v492, 7
      %v494 = vsub.s32 0, %v493
      %v495 = vrot.slane %v490, %v494
      %v496 = vlaneseq
      %v497 = vshrl.u32 %v496, 7
      %v498 = vsub.s32 1, %v497
      %v499 = vrot.slane %v490, %v498
      %v500 = vlaneseq
      %v501 = vshrl.u32 %v500, 7
      %v502 = vsub.s32 2, %v501
      %v503 = vrot.slane %v490, %v502
      %v504 = vlaneseq
      %v505 = vshrl.u32 %v504, 7
      %v506 = vsub.s32 3, %v505
      %v507 = vrot.slane %v490, %v506
      %v512 = vmul.f32 %v487, %v495
      %v513 = vmul.f32 %v486, %v499
      %v514 = vmul.f32 %v485, %v503
      %v515 = vmul.f32 %v488, %v507
      %516 = vst [vmem:[#allocation2 + $0x60] sm:$0xf] %v512
      %517 = vst [vmem:[#allocation2 + $0x68] sm:$0xf] %v513
      %518 = vst [vmem:[#allocation2 + $0x70] sm:$0xf] %v514
      %519 = vst [vmem:[#allocation2 + $0x78] sm:$0xf] %v515
      %520 = vrot.lane.b32.xlu0 %v206, 112
      %v521 = vpop.permute.xlu0 %520
      %522 = vrot.lane.b32.xlu0 %v210, 112
      %v523 = vpop.permute.xlu0 %522
      %524 = vrot.lane.b32.xlu0 %v208, 112
      %v525 = vpop.permute.xlu0 %524
      %526 = vrot.lane.b32.xlu0 %v213, 112
      %v527 = vpop.permute.xlu0 %526
      %vm528 = vcmp.lt.s32.totalorder %v224, 112
      %v529 = vsel %vm528, %v525, %v527
      %v530 = vsel %vm528, %v523, %v525
      %v531 = vsel %vm528, %v521, %v523
      %v532 = vsel %vm528, %v527, %v521
      %s533 = scalar_lea.vmem %s3, 28
      %v534 = vld [vmem:[%s533] sm:$0xf]
      %v536 = vlaneseq
      %v537 = vshrl.u32 %v536, 7
      %v538 = vsub.s32 0, %v537
      %v539 = vrot.slane %v534, %v538
      %v540 = vlaneseq
      %v541 = vshrl.u32 %v540, 7
      %v542 = vsub.s32 1, %v541
      %v543 = vrot.slane %v534, %v542
      %v544 = vlaneseq
      %v545 = vshrl.u32 %v544, 7
      %v546 = vsub.s32 2, %v545
      %v547 = vrot.slane %v534, %v546
      %v548 = vlaneseq
      %v549 = vshrl.u32 %v548, 7
      %v550 = vsub.s32 3, %v549
      %v551 = vrot.slane %v534, %v550
      %v556 = vmul.f32 %v531, %v539
      %v557 = vmul.f32 %v530, %v543
      %v558 = vmul.f32 %v529, %v547
      %v559 = vmul.f32 %v532, %v551
      %v564 = vrot.slane %v556, 4
      %v565 = vrot.slane %v557, 4
      %v566 = vrot.slane %v558, 4
      %v567 = vrot.slane %v559, 4
      %572 = vst [vmem:[#allocation2 + $0x60] sm:$0xf0] %v564
      %573 = vst [vmem:[#allocation2 + $0x68] sm:$0xf0] %v565
      %574 = vst [vmem:[#allocation2 + $0x70] sm:$0xf0] %v566
      %575 = vst [vmem:[#allocation2 + $0x78] sm:$0xf0] %v567
      %576 = vrot.lane.b32.xlu0 %v206, 111
      %v577 = vpop.permute.xlu0 %576
      %578 = vrot.lane.b32.xlu0 %v210, 111
      %v579 = vpop.permute.xlu0 %578
      %580 = vrot.lane.b32.xlu0 %v208, 111
      %v581 = vpop.permute.xlu0 %580
      %582 = vrot.lane.b32.xlu0 %v213, 111
      %v583 = vpop.permute.xlu0 %582
      %vm584 = vcmp.lt.s32.totalorder %v224, 111
      %v585 = vsel %vm584, %v581, %v583
      %v586 = vsel %vm584, %v579, %v581
      %v587 = vsel %vm584, %v577, %v579
      %v588 = vsel %vm584, %v583, %v577
      %s589 = scalar_lea.vmem %s3, 32
      %v590 = vld [vmem:[%s589] sm:$0xf]
      %v592 = vlaneseq
      %v593 = vshrl.u32 %v592, 7
      %v594 = vsub.s32 0, %v593
      %v595 = vrot.slane %v590, %v594
      %v596 = vlaneseq
      %v597 = vshrl.u32 %v596, 7
      %v598 = vsub.s32 1, %v597
      %v599 = vrot.slane %v590, %v598
      %v600 = vlaneseq
      %v601 = vshrl.u32 %v600, 7
      %v602 = vsub.s32 2, %v601
      %v603 = vrot.slane %v590, %v602
      %v604 = vlaneseq
      %v605 = vshrl.u32 %v604, 7
      %v606 = vsub.s32 3, %v605
      %v607 = vrot.slane %v590, %v606
      %v612 = vmul.f32 %v587, %v595
      %v613 = vmul.f32 %v586, %v599
      %v614 = vmul.f32 %v585, %v603
      %v615 = vmul.f32 %v588, %v607
      %616 = vst [vmem:[#allocation2 + $0x80] sm:$0xf] %v612
      %617 = vst [vmem:[#allocation2 + $0x88] sm:$0xf] %v613
      %618 = vst [vmem:[#allocation2 + $0x90] sm:$0xf] %v614
      %619 = vst [vmem:[#allocation2 + $0x98] sm:$0xf] %v615
      %v620 = vld [vmem:[%s1] sm:$0xff]
      %v621 = vld [vmem:[#allocation2] sm:$0xff]
      %v622 = vld [vmem:[#allocation2 + $0x8] sm:$0xff]
      %v623 = vld [vmem:[#allocation2 + $0x10] sm:$0xff]
      %v624 = vld [vmem:[#allocation2 + $0x18] sm:$0xff]
      %v625 = vld [vmem:[#allocation2 + $0x20] sm:$0xff]
      %v626 = vld [vmem:[#allocation2 + $0x28] sm:$0xff]
      %v627 = vld [vmem:[#allocation2 + $0x30] sm:$0xff]
      %v628 = vld [vmem:[#allocation2 + $0x38] sm:$0xff]
      %v629 = vld [vmem:[#allocation2 + $0x40] sm:$0xff]
      %v630 = vld [vmem:[#allocation2 + $0x48] sm:$0xff]
      %v631 = vld [vmem:[#allocation2 + $0x50] sm:$0xff]
      %v632 = vld [vmem:[#allocation2 + $0x58] sm:$0xff]
      %v633 = vld [vmem:[#allocation2 + $0x60] sm:$0xff]
      %v634 = vld [vmem:[#allocation2 + $0x68] sm:$0xff]
      %v635 = vld [vmem:[#allocation2 + $0x70] sm:$0xff]
      %v636 = vld [vmem:[#allocation2 + $0x78] sm:$0xff]
      %v637 = vld [vmem:[#allocation2 + $0x80] sm:$0xf]
      %v638 = vld [vmem:[#allocation2 + $0x88] sm:$0xf]
      %v639 = vld [vmem:[#allocation2 + $0x90] sm:$0xf]
      %v640 = vld [vmem:[#allocation2 + $0x98] sm:$0xf]
      %vm641 = vcmask 293888
      %v643 = vsel %vm641, %v620, 0
      %vm645 = vcmask 1043456
      %v647 = vsel %vm645, %v637, 0
      %v650 = vsel %vm645, %v638, 0
      %v653 = vsel %vm645, %v639, 0
      %v656 = vsel %vm645, %v640, 0
      %658 = vmatprep.subr.mxu0 0.0
      %659 = vmatpush1.msra.mxu0 0.0
      %660 = vmatprep.subr.mxu0 0.0
      %661 = vmatpush1.msra.mxu0 0.0
      %662 = vmatprep.subr.mxu0 0.0
      %663 = vmatpush1.msra.mxu0 0.0
      %664 = vmatprep.subr.mxu0 0.0
      %665 = vmatpush1.msra.mxu0 0.0
      %666 = vmatprep.subr.mxu0 0.0
      %667 = vmatpush1.msra.mxu0 0.0
      %668 = vmatprep.subr.mxu0 0.0
      %669 = vmatpush1.msra.mxu0 0.0
      %670 = vmatprep.subr.mxu0 0.0
      %671 = vmatpush1.msra.mxu0 0.0
      %672 = vmatprep.subr.mxu0 0.0
      %673 = vmatpush1.msra.mxu0 0.0
      %674 = vmatprep.subr.mxu0 0.0
      %675 = vmatpush1.msra.mxu0 0.0
      %676 = vmatprep.subr.mxu0 0.0
      %677 = vmatpush1.msra.mxu0 0.0
      %678 = vmatprep.subr.mxu0 0.0
      %679 = vmatpush1.msra.mxu0 0.0
      %680 = vmatprep.subr.mxu0 %v650
      %681 = vmatpush1.msra.mxu0 %v647
      %682 = vmatprep.subr.mxu0 %v634
      %683 = vmatpush1.msra.mxu0 %v633
      %684 = vmatprep.subr.mxu0 %v630
      %685 = vmatpush1.msra.mxu0 %v629
      %686 = vmatprep.subr.mxu0 %v626
      %687 = vmatpush1.msra.mxu0 %v625
      %688 = vmatprep.subr.mxu0 %v622
      %689 = vmatpush1.msra.mxu0 %v621
      %690 = vmatprep.subr.mxu0 0.0
      %691 = vmatpush2.msra.mxu0 0.0
      %692 = vmatprep.subr.mxu0 0.0
      %693 = vmatpush2.msra.mxu0 0.0
      %694 = vmatprep.subr.mxu0 0.0
      %695 = vmatpush2.msra.mxu0 0.0
      %696 = vmatprep.subr.mxu0 0.0
      %697 = vmatpush2.msra.mxu0 0.0
      %698 = vmatprep.subr.mxu0 0.0
      %699 = vmatpush2.msra.mxu0 0.0
      %700 = vmatprep.subr.mxu0 0.0
      %701 = vmatpush2.msra.mxu0 0.0
      %702 = vmatprep.subr.mxu0 0.0
      %703 = vmatpush2.msra.mxu0 0.0
      %704 = vmatprep.subr.mxu0 0.0
      %705 = vmatpush2.msra.mxu0 0.0
      %706 = vmatprep.subr.mxu0 0.0
      %707 = vmatpush2.msra.mxu0 0.0
      %708 = vmatprep.subr.mxu0 0.0
      %709 = vmatpush2.msra.mxu0 0.0
      %710 = vmatprep.subr.mxu0 0.0
      %711 = vmatpush2.msra.mxu0 0.0
      %712 = vmatprep.subr.mxu0 0.0
      %713 = vmatpush2.msra.mxu0 0.0
      %714 = vmatprep.subr.mxu0 0.0
      %715 = vmatpush2.msra.mxu0 0.0
      %716 = vmatprep.subr.mxu0 0.0
      %717 = vmatpush2.msra.mxu0 0.0
      %718 = vmatprep.subr.mxu0 0.0
      %719 = vmatpush2.msra.mxu0 0.0
      %720 = vmatprep.subr.mxu0 0.0
      %721 = vmatpush2.msra.mxu0 0.0
      %722 = vmatprep.mubr.f32.mxu0 0.0
      %723 = vmatmul.mubr.f32.gmra.mxu0 %v643
      %v724 = vpop.f32.mrf.mxu0
      %v725 = vadd.f32 0.0, %v724
      %v726 = vpop.f32.mrf.mxu0
      %v727 = vadd.f32 0.0, %v726
      %728 = vdwg.mxu0
      %729 = vmatprep.subr.mxu0 0.0
      %730 = vmatpush1.msra.mxu0 0.0
      %731 = vmatprep.subr.mxu0 0.0
      %732 = vmatpush1.msra.mxu0 0.0
      %733 = vmatprep.subr.mxu0 0.0
      %734 = vmatpush1.msra.mxu0 0.0
      %735 = vmatprep.subr.mxu0 0.0
      %736 = vmatpush1.msra.mxu0 0.0
      %737 = vmatprep.subr.mxu0 0.0
      %738 = vmatpush1.msra.mxu0 0.0
      %739 = vmatprep.subr.mxu0 0.0
      %740 = vmatpush1.msra.mxu0 0.0
      %741 = vmatprep.subr.mxu0 0.0
      %742 = vmatpush1.msra.mxu0 0.0
      %743 = vmatprep.subr.mxu0 0.0
      %744 = vmatpush1.msra.mxu0 0.0
      %745 = vmatprep.subr.mxu0 0.0
      %746 = vmatpush1.msra.mxu0 0.0
      %747 = vmatprep.subr.mxu0 0.0
      %748 = vmatpush1.msra.mxu0 0.0
      %749 = vmatprep.subr.mxu0 0.0
      %750 = vmatpush1.msra.mxu0 0.0
      %751 = vmatprep.subr.mxu0 %v656
      %752 = vmatpush1.msra.mxu0 %v653
      %753 = vmatprep.subr.mxu0 %v636
      %754 = vmatpush1.msra.mxu0 %v635
      %755 = vmatprep.subr.mxu0 %v632
      %756 = vmatpush1.msra.mxu0 %v631
      %757 = vmatprep.subr.mxu0 %v628
      %758 = vmatpush1.msra.mxu0 %v627
      %759 = vmatprep.subr.mxu0 %v624
      %760 = vmatpush1.msra.mxu0 %v623
      %761 = vmatprep.subr.mxu0 0.0
      %762 = vmatpush2.msra.mxu0 0.0
      %763 = vmatprep.subr.mxu0 0.0
      %764 = vmatpush2.msra.mxu0 0.0
      %765 = vmatprep.subr.mxu0 0.0
      %766 = vmatpush2.msra.mxu0 0.0
      %767 = vmatprep.subr.mxu0 0.0
      %768 = vmatpush2.msra.mxu0 0.0
      %769 = vmatprep.subr.mxu0 0.0
      %770 = vmatpush2.msra.mxu0 0.0
      %771 = vmatprep.subr.mxu0 0.0
      %772 = vmatpush2.msra.mxu0 0.0
      %773 = vmatprep.subr.mxu0 0.0
      %774 = vmatpush2.msra.mxu0 0.0
      %775 = vmatprep.subr.mxu0 0.0
      %776 = vmatpush2.msra.mxu0 0.0
      %777 = vmatprep.subr.mxu0 0.0
      %778 = vmatpush2.msra.mxu0 0.0
      %779 = vmatprep.subr.mxu0 0.0
      %780 = vmatpush2.msra.mxu0 0.0
      %781 = vmatprep.subr.mxu0 0.0
      %782 = vmatpush2.msra.mxu0 0.0
      %783 = vmatprep.subr.mxu0 0.0
      %784 = vmatpush2.msra.mxu0 0.0
      %785 = vmatprep.subr.mxu0 0.0
      %786 = vmatpush2.msra.mxu0 0.0
      %787 = vmatprep.subr.mxu0 0.0
      %788 = vmatpush2.msra.mxu0 0.0
      %789 = vmatprep.subr.mxu0 0.0
      %790 = vmatpush2.msra.mxu0 0.0
      %791 = vmatprep.subr.mxu0 0.0
      %792 = vmatpush2.msra.mxu0 0.0
      %793 = vmatprep.mubr.f32.mxu0 0.0
      %794 = vmatmul.mubr.f32.gmra.mxu0 %v643
      %v795 = vpop.f32.mrf.mxu0
      %v796 = vadd.f32 0.0, %v795
      %v797 = vpop.f32.mrf.mxu0
      %v798 = vadd.f32 0.0, %v797
      %799 = vdwg.mxu0
      %v800 = vadd.f32 %v725, %v727
      %801 = vadd.xlane.f32.xlu0 %v800
      %v802 = vpop.xlane.xlu0 %801
      %v803 = vmul.f32 %v725, %v725
      %v804 = vmul.f32 %v727, %v727
      %v805 = vadd.f32 %v803, %v804
      %806 = vadd.xlane.f32.xlu0 %v805
      %v807 = vpop.xlane.xlu0 %806
      %v808 = vmul.f32 %v802, 0.00390625
      %v809 = vmul.f32 %v807, 0.00390625
      %v810 = vmul.f32 %v808, %v808
      %v811 = vsub.f32 %v809, %v810
      %v812 = vadd.f32 %v811, 1e-05
      %v813 = vrsqrt.pop %v812
      %v814 = vmul.f32 %v725, %v813
      %v815 = vmul.f32 %v727, %v813
      %v816 = vmul.f32 %v808, %v813
      %v817 = vsub.f32 %v814, %v816
      %v818 = vsub.f32 %v815, %v816
      %v819 = vmax.f32 %v817, 0.0
      %v820 = vmax.f32 %v818, 0.0
      %v821 = vadd.f32 %v796, %v798
      %822 = vadd.xlane.f32.xlu0 %v821
      %v823 = vpop.xlane.xlu0 %822
      %v824 = vmul.f32 %v796, %v796
      %v825 = vmul.f32 %v798, %v798
      %v826 = vadd.f32 %v824, %v825
      %827 = vadd.xlane.f32.xlu0 %v826
      %v828 = vpop.xlane.xlu0 %827
      %v829 = vmul.f32 %v823, 0.00390625
      %v830 = vmul.f32 %v828, 0.00390625
      %v831 = vmul.f32 %v829, %v829
      %v832 = vsub.f32 %v830, %v831
      %v833 = vadd.f32 %v832, 1e-05
      %v834 = vrsqrt.pop %v833
      %v835 = vmul.f32 %v796, %v834
      %v836 = vmul.f32 %v798, %v834
      %v837 = vmul.f32 %v829, %v834
      %v838 = vsub.f32 %v835, %v837
      %v839 = vsub.f32 %v836, %v837
      %v840 = vmax.f32 %v838, 0.0
      %v841 = vmax.f32 %v839, 0.0
      %842 = vrot.lane.b32.xlu0 %v819, 17
      %v843 = vpop.permute.xlu0 %842
      %844 = vrot.lane.b32.xlu0 %v820, 17
      %v845 = vpop.permute.xlu0 %844
      %846 = vrot.lane.b32.xlu0 %v840, 17
      %v847 = vpop.permute.xlu0 %846
      %848 = vrot.lane.b32.xlu0 %v841, 17
      %v849 = vpop.permute.xlu0 %848
      %v850 = vsel %vm225, %v847, %v849
      %v851 = vsel %vm225, %v845, %v847
      %v852 = vsel %vm225, %v843, %v845
      %v853 = vsel %vm225, %v849, %v843
      %v854 = vld [vmem:[%s3] sm:$0xf]
      %v856 = vlaneseq
      %v857 = vshrl.u32 %v856, 7
      %v858 = vsub.s32 0, %v857
      %v859 = vrot.slane %v854, %v858
      %v860 = vlaneseq
      %v861 = vshrl.u32 %v860, 7
      %v862 = vsub.s32 1, %v861
      %v863 = vrot.slane %v854, %v862
      %v864 = vlaneseq
      %v865 = vshrl.u32 %v864, 7
      %v866 = vsub.s32 2, %v865
      %v867 = vrot.slane %v854, %v866
      %v868 = vlaneseq
      %v869 = vshrl.u32 %v868, 7
      %v870 = vsub.s32 3, %v869
      %v871 = vrot.slane %v854, %v870
      %v876 = vmul.f32 %v853, %v859
      %v877 = vmul.f32 %v852, %v863
      %v878 = vmul.f32 %v851, %v867
      %v879 = vmul.f32 %v850, %v871
      %880 = vst [vmem:[#allocation3] sm:$0xff] %v876
      %881 = vst [vmem:[#allocation3 + $0x8] sm:$0xff] %v877
      %882 = vst [vmem:[#allocation3 + $0x10] sm:$0xff] %v878
      %883 = vst [vmem:[#allocation3 + $0x18] sm:$0xff] %v879
      %884 = vrot.lane.b32.xlu0 %v819, 16
      %v885 = vpop.permute.xlu0 %884
      %886 = vrot.lane.b32.xlu0 %v820, 16
      %v887 = vpop.permute.xlu0 %886
      %888 = vrot.lane.b32.xlu0 %v840, 16
      %v889 = vpop.permute.xlu0 %888
      %890 = vrot.lane.b32.xlu0 %v841, 16
      %v891 = vpop.permute.xlu0 %890
      %v892 = vsel %vm268, %v889, %v891
      %v893 = vsel %vm268, %v887, %v889
      %v894 = vsel %vm268, %v885, %v887
      %v895 = vsel %vm268, %v891, %v885
      %v896 = vld [vmem:[%s273] sm:$0xf]
      %v898 = vlaneseq
      %v899 = vshrl.u32 %v898, 7
      %v900 = vsub.s32 0, %v899
      %v901 = vrot.slane %v896, %v900
      %v902 = vlaneseq
      %v903 = vshrl.u32 %v902, 7
      %v904 = vsub.s32 1, %v903
      %v905 = vrot.slane %v896, %v904
      %v906 = vlaneseq
      %v907 = vshrl.u32 %v906, 7
      %v908 = vsub.s32 2, %v907
      %v909 = vrot.slane %v896, %v908
      %v910 = vlaneseq
      %v911 = vshrl.u32 %v910, 7
      %v912 = vsub.s32 3, %v911
      %v913 = vrot.slane %v896, %v912
      %v918 = vmul.f32 %v895, %v901
      %v919 = vmul.f32 %v894, %v905
      %v920 = vmul.f32 %v893, %v909
      %v921 = vmul.f32 %v892, %v913
      %922 = vst [vmem:[#allocation3 + $0x20] sm:$0xff] %v918
      %923 = vst [vmem:[#allocation3 + $0x28] sm:$0xff] %v919
      %924 = vst [vmem:[#allocation3 + $0x30] sm:$0xff] %v920
      %925 = vst [vmem:[#allocation3 + $0x38] sm:$0xff] %v921
      %926 = vrot.lane.b32.xlu0 %v819, 15
      %v927 = vpop.permute.xlu0 %926
      %928 = vrot.lane.b32.xlu0 %v820, 15
      %v929 = vpop.permute.xlu0 %928
      %930 = vrot.lane.b32.xlu0 %v840, 15
      %v931 = vpop.permute.xlu0 %930
      %932 = vrot.lane.b32.xlu0 %v841, 15
      %v933 = vpop.permute.xlu0 %932
      %v934 = vsel %vm324, %v931, %v933
      %v935 = vsel %vm324, %v929, %v931
      %v936 = vsel %vm324, %v927, %v929
      %v937 = vsel %vm324, %v933, %v927
      %v938 = vld [vmem:[%s329] sm:$0xf]
      %v940 = vlaneseq
      %v941 = vshrl.u32 %v940, 7
      %v942 = vsub.s32 0, %v941
      %v943 = vrot.slane %v938, %v942
      %v944 = vlaneseq
      %v945 = vshrl.u32 %v944, 7
      %v946 = vsub.s32 1, %v945
      %v947 = vrot.slane %v938, %v946
      %v948 = vlaneseq
      %v949 = vshrl.u32 %v948, 7
      %v950 = vsub.s32 2, %v949
      %v951 = vrot.slane %v938, %v950
      %v952 = vlaneseq
      %v953 = vshrl.u32 %v952, 7
      %v954 = vsub.s32 3, %v953
      %v955 = vrot.slane %v938, %v954
      %v960 = vmul.f32 %v937, %v943
      %v961 = vmul.f32 %v936, %v947
      %v962 = vmul.f32 %v935, %v951
      %v963 = vmul.f32 %v934, %v955
      %964 = vst [vmem:[#allocation3 + $0x40] sm:$0xff] %v960
      %965 = vst [vmem:[#allocation3 + $0x48] sm:$0xff] %v961
      %966 = vst [vmem:[#allocation3 + $0x50] sm:$0xff] %v962
      %967 = vst [vmem:[#allocation3 + $0x58] sm:$0xff] %v963
      %968 = vrot.lane.b32.xlu0 %v819, 1
      %v969 = vpop.permute.xlu0 %968
      %970 = vrot.lane.b32.xlu0 %v820, 1
      %v971 = vpop.permute.xlu0 %970
      %972 = vrot.lane.b32.xlu0 %v840, 1
      %v973 = vpop.permute.xlu0 %972
      %974 = vrot.lane.b32.xlu0 %v841, 1
      %v975 = vpop.permute.xlu0 %974
      %v976 = vsel %vm368, %v973, %v975
      %v977 = vsel %vm368, %v971, %v973
      %v978 = vsel %vm368, %v969, %v971
      %v979 = vsel %vm368, %v975, %v969
      %v980 = vld [vmem:[%s373] sm:$0xf]
      %v982 = vlaneseq
      %v983 = vshrl.u32 %v982, 7
      %v984 = vsub.s32 0, %v983
      %v985 = vrot.slane %v980, %v984
      %v986 = vlaneseq
      %v987 = vshrl.u32 %v986, 7
      %v988 = vsub.s32 1, %v987
      %v989 = vrot.slane %v980, %v988
      %v990 = vlaneseq
      %v991 = vshrl.u32 %v990, 7
      %v992 = vsub.s32 2, %v991
      %v993 = vrot.slane %v980, %v992
      %v994 = vlaneseq
      %v995 = vshrl.u32 %v994, 7
      %v996 = vsub.s32 3, %v995
      %v997 = vrot.slane %v980, %v996
      %v1002 = vmul.f32 %v979, %v985
      %v1003 = vmul.f32 %v978, %v989
      %v1004 = vmul.f32 %v977, %v993
      %v1005 = vmul.f32 %v976, %v997
      %1006 = vst [vmem:[#allocation3 + $0x60] sm:$0xff] %v1002
      %1007 = vst [vmem:[#allocation3 + $0x68] sm:$0xff] %v1003
      %1008 = vst [vmem:[#allocation3 + $0x70] sm:$0xff] %v1004
      %1009 = vst [vmem:[#allocation3 + $0x78] sm:$0xff] %v1005
      %1010 = vst [vmem:[#allocation3 + $0x80] sm:$0xff] %v819
      %1011 = vst [vmem:[#allocation3 + $0x88] sm:$0xff] %v820
      %1012 = vst [vmem:[#allocation3 + $0x90] sm:$0xff] %v840
      %1013 = vst [vmem:[#allocation3 + $0x98] sm:$0xff] %v841
      %1014 = vrot.lane.b32.xlu0 %v819, 127
      %v1015 = vpop.permute.xlu0 %1014
      %1016 = vrot.lane.b32.xlu0 %v820, 127
      %v1017 = vpop.permute.xlu0 %1016
      %1018 = vrot.lane.b32.xlu0 %v840, 127
      %v1019 = vpop.permute.xlu0 %1018
      %1020 = vrot.lane.b32.xlu0 %v841, 127
      %v1021 = vpop.permute.xlu0 %1020
      %v1022 = vsel %vm428, %v1019, %v1021
      %v1023 = vsel %vm428, %v1017, %v1019
      %v1024 = vsel %vm428, %v1015, %v1017
      %v1025 = vsel %vm428, %v1021, %v1015
      %v1026 = vld [vmem:[%s433] sm:$0xf]
      %v1028 = vlaneseq
      %v1029 = vshrl.u32 %v1028, 7
      %v1030 = vsub.s32 0, %v1029
      %v1031 = vrot.slane %v1026, %v1030
      %v1032 = vlaneseq
      %v1033 = vshrl.u32 %v1032, 7
      %v1034 = vsub.s32 1, %v1033
      %v1035 = vrot.slane %v1026, %v1034
      %v1036 = vlaneseq
      %v1037 = vshrl.u32 %v1036, 7
      %v1038 = vsub.s32 2, %v1037
      %v1039 = vrot.slane %v1026, %v1038
      %v1040 = vlaneseq
      %v1041 = vshrl.u32 %v1040, 7
      %v1042 = vsub.s32 3, %v1041
      %v1043 = vrot.slane %v1026, %v1042
      %v1048 = vmul.f32 %v1024, %v1031
      %v1049 = vmul.f32 %v1023, %v1035
      %v1050 = vmul.f32 %v1022, %v1039
      %v1051 = vmul.f32 %v1025, %v1043
      %1052 = vst [vmem:[#allocation3 + $0xa0] sm:$0xff] %v1048
      %1053 = vst [vmem:[#allocation3 + $0xa8] sm:$0xff] %v1049
      %1054 = vst [vmem:[#allocation3 + $0xb0] sm:$0xff] %v1050
      %1055 = vst [vmem:[#allocation3 + $0xb8] sm:$0xff] %v1051
      %1056 = vrot.lane.b32.xlu0 %v819, 113
      %v1057 = vpop.permute.xlu0 %1056
      %1058 = vrot.lane.b32.xlu0 %v820, 113
      %v1059 = vpop.permute.xlu0 %1058
      %1060 = vrot.lane.b32.xlu0 %v840, 113
      %v1061 = vpop.permute.xlu0 %1060
      %1062 = vrot.lane.b32.xlu0 %v841, 113
      %v1063 = vpop.permute.xlu0 %1062
      %v1064 = vsel %vm484, %v1061, %v1063
      %v1065 = vsel %vm484, %v1059, %v1061
      %v1066 = vsel %vm484, %v1057, %v1059
      %v1067 = vsel %vm484, %v1063, %v1057
      %v1068 = vld [vmem:[%s489] sm:$0xf]
      %v1070 = vlaneseq
      %v1071 = vshrl.u32 %v1070, 7
      %v1072 = vsub.s32 0, %v1071
      %v1073 = vrot.slane %v1068, %v1072
      %v1074 = vlaneseq
      %v1075 = vshrl.u32 %v1074, 7
      %v1076 = vsub.s32 1, %v1075
      %v1077 = vrot.slane %v1068, %v1076
      %v1078 = vlaneseq
      %v1079 = vshrl.u32 %v1078, 7
      %v1080 = vsub.s32 2, %v1079
      %v1081 = vrot.slane %v1068, %v1080
      %v1082 = vlaneseq
      %v1083 = vshrl.u32 %v1082, 7
      %v1084 = vsub.s32 3, %v1083
      %v1085 = vrot.slane %v1068, %v1084
      %v1090 = vmul.f32 %v1066, %v1073
      %v1091 = vmul.f32 %v1065, %v1077
      %v1092 = vmul.f32 %v1064, %v1081
      %v1093 = vmul.f32 %v1067, %v1085
      %1094 = vst [vmem:[#allocation3 + $0xc0] sm:$0xff] %v1090
      %1095 = vst [vmem:[#allocation3 + $0xc8] sm:$0xff] %v1091
      %1096 = vst [vmem:[#allocation3 + $0xd0] sm:$0xff] %v1092
      %1097 = vst [vmem:[#allocation3 + $0xd8] sm:$0xff] %v1093
      %1098 = vrot.lane.b32.xlu0 %v819, 112
      %v1099 = vpop.permute.xlu0 %1098
      %1100 = vrot.lane.b32.xlu0 %v820, 112
      %v1101 = vpop.permute.xlu0 %1100
      %1102 = vrot.lane.b32.xlu0 %v840, 112
      %v1103 = vpop.permute.xlu0 %1102
      %1104 = vrot.lane.b32.xlu0 %v841, 112
      %v1105 = vpop.permute.xlu0 %1104
      %v1106 = vsel %vm528, %v1103, %v1105
      %v1107 = vsel %vm528, %v1101, %v1103
      %v1108 = vsel %vm528, %v1099, %v1101
      %v1109 = vsel %vm528, %v1105, %v1099
      %v1110 = vld [vmem:[%s533] sm:$0xf]
      %v1112 = vlaneseq
      %v1113 = vshrl.u32 %v1112, 7
      %v1114 = vsub.s32 0, %v1113
      %v1115 = vrot.slane %v1110, %v1114
      %v1116 = vlaneseq
      %v1117 = vshrl.u32 %v1116, 7
      %v1118 = vsub.s32 1, %v1117
      %v1119 = vrot.slane %v1110, %v1118
      %v1120 = vlaneseq
      %v1121 = vshrl.u32 %v1120, 7
      %v1122 = vsub.s32 2, %v1121
      %v1123 = vrot.slane %v1110, %v1122
      %v1124 = vlaneseq
      %v1125 = vshrl.u32 %v1124, 7
      %v1126 = vsub.s32 3, %v1125
      %v1127 = vrot.slane %v1110, %v1126
      %v1132 = vmul.f32 %v1108, %v1115
      %v1133 = vmul.f32 %v1107, %v1119
      %v1134 = vmul.f32 %v1106, %v1123
      %v1135 = vmul.f32 %v1109, %v1127
      %1136 = vst [vmem:[#allocation3 + $0xe0] sm:$0xff] %v1132
      %1137 = vst [vmem:[#allocation3 + $0xe8] sm:$0xff] %v1133
      %1138 = vst [vmem:[#allocation3 + $0xf0] sm:$0xff] %v1134
      %1139 = vst [vmem:[#allocation3 + $0xf8] sm:$0xff] %v1135
      %1140 = vrot.lane.b32.xlu0 %v819, 111
      %v1141 = vpop.permute.xlu0 %1140
      %1142 = vrot.lane.b32.xlu0 %v820, 111
      %v1143 = vpop.permute.xlu0 %1142
      %1144 = vrot.lane.b32.xlu0 %v840, 111
      %v1145 = vpop.permute.xlu0 %1144
      %1146 = vrot.lane.b32.xlu0 %v841, 111
      %v1147 = vpop.permute.xlu0 %1146
      %v1148 = vsel %vm584, %v1145, %v1147
      %v1149 = vsel %vm584, %v1143, %v1145
      %v1150 = vsel %vm584, %v1141, %v1143
      %v1151 = vsel %vm584, %v1147, %v1141
      %v1152 = vld [vmem:[%s589] sm:$0xf]
      %v1154 = vlaneseq
      %v1155 = vshrl.u32 %v1154, 7
      %v1156 = vsub.s32 0, %v1155
      %v1157 = vrot.slane %v1152, %v1156
      %v1158 = vlaneseq
      %v1159 = vshrl.u32 %v1158, 7
      %v1160 = vsub.s32 1, %v1159
      %v1161 = vrot.slane %v1152, %v1160
      %v1162 = vlaneseq
      %v1163 = vshrl.u32 %v1162, 7
      %v1164 = vsub.s32 2, %v1163
      %v1165 = vrot.slane %v1152, %v1164
      %v1166 = vlaneseq
      %v1167 = vshrl.u32 %v1166, 7
      %v1168 = vsub.s32 3, %v1167
      %v1169 = vrot.slane %v1152, %v1168
      %v1174 = vmul.f32 %v1150, %v1157
      %v1175 = vmul.f32 %v1149, %v1161
      %v1176 = vmul.f32 %v1148, %v1165
      %v1177 = vmul.f32 %v1151, %v1169
      %1178 = vst [vmem:[#allocation3 + $0x100] sm:$0xff] %v1174
      %1179 = vst [vmem:[#allocation3 + $0x108] sm:$0xff] %v1175
      %1180 = vst [vmem:[#allocation3 + $0x110] sm:$0xff] %v1176
      %1181 = vst [vmem:[#allocation3 + $0x118] sm:$0xff] %v1177
      %v1182 = vld [vmem:[%s2] sm:$0xf]
      %v1183 = vld [vmem:[#allocation3] sm:$0xff]
      %v1184 = vld [vmem:[#allocation3 + $0x8] sm:$0xff]
      %v1185 = vld [vmem:[#allocation3 + $0x10] sm:$0xff]
      %v1186 = vld [vmem:[#allocation3 + $0x18] sm:$0xff]
      %v1187 = vld [vmem:[#allocation3 + $0x20] sm:$0xff]
      %v1188 = vld [vmem:[#allocation3 + $0x28] sm:$0xff]
      %v1189 = vld [vmem:[#allocation3 + $0x30] sm:$0xff]
      %v1190 = vld [vmem:[#allocation3 + $0x38] sm:$0xff]
      %v1191 = vld [vmem:[#allocation3 + $0x40] sm:$0xff]
      %v1192 = vld [vmem:[#allocation3 + $0x48] sm:$0xff]
      %v1193 = vld [vmem:[#allocation3 + $0x50] sm:$0xff]
      %v1194 = vld [vmem:[#allocation3 + $0x58] sm:$0xff]
      %v1195 = vld [vmem:[#allocation3 + $0x60] sm:$0xff]
      %v1196 = vld [vmem:[#allocation3 + $0x68] sm:$0xff]
      %v1197 = vld [vmem:[#allocation3 + $0x70] sm:$0xff]
      %v1198 = vld [vmem:[#allocation3 + $0x78] sm:$0xff]
      %v1199 = vld [vmem:[#allocation3 + $0x80] sm:$0xff]
      %v1200 = vld [vmem:[#allocation3 + $0x88] sm:$0xff]
      %v1201 = vld [vmem:[#allocation3 + $0x90] sm:$0xff]
      %v1202 = vld [vmem:[#allocation3 + $0x98] sm:$0xff]
      %v1203 = vld [vmem:[#allocation3 + $0xa0] sm:$0xff]
      %v1204 = vld [vmem:[#allocation3 + $0xa8] sm:$0xff]
      %v1205 = vld [vmem:[#allocation3 + $0xb0] sm:$0xff]
      %v1206 = vld [vmem:[#allocation3 + $0xb8] sm:$0xff]
      %v1207 = vld [vmem:[#allocation3 + $0xc0] sm:$0xff]
      %v1208 = vld [vmem:[#allocation3 + $0xc8] sm:$0xff]
      %v1209 = vld [vmem:[#allocation3 + $0xd0] sm:$0xff]
      %v1210 = vld [vmem:[#allocation3 + $0xd8] sm:$0xff]
      %v1211 = vld [vmem:[#allocation3 + $0xe0] sm:$0xff]
      %v1212 = vld [vmem:[#allocation3 + $0xe8] sm:$0xff]
      %v1213 = vld [vmem:[#allocation3 + $0xf0] sm:$0xff]
      %v1214 = vld [vmem:[#allocation3 + $0xf8] sm:$0xff]
      %v1215 = vld [vmem:[#allocation3 + $0x100] sm:$0xff]
      %v1216 = vld [vmem:[#allocation3 + $0x108] sm:$0xff]
      %v1217 = vld [vmem:[#allocation3 + $0x110] sm:$0xff]
      %v1218 = vld [vmem:[#allocation3 + $0x118] sm:$0xff]
      %vm1219 = vcmask 588800
      %v1221 = vsel %vm1219, %v1182, 0
      %1223 = vmatprep.subr.mxu0 0.0
      %1224 = vmatpush1.msra.mxu0 0.0
      %1225 = vmatprep.subr.mxu0 0.0
      %1226 = vmatpush1.msra.mxu0 0.0
      %1227 = vmatprep.subr.mxu0 0.0
      %1228 = vmatpush1.msra.mxu0 0.0
      %1229 = vmatprep.subr.mxu0 0.0
      %1230 = vmatpush1.msra.mxu0 0.0
      %1231 = vmatprep.subr.mxu0 0.0
      %1232 = vmatpush1.msra.mxu0 0.0
      %1233 = vmatprep.subr.mxu0 0.0
      %1234 = vmatpush1.msra.mxu0 0.0
      %1235 = vmatprep.subr.mxu0 0.0
      %1236 = vmatpush1.msra.mxu0 0.0
      %1237 = vmatprep.subr.mxu0 %v1216
      %1238 = vmatpush1.msra.mxu0 %v1215
      %1239 = vmatprep.subr.mxu0 %v1212
      %1240 = vmatpush1.msra.mxu0 %v1211
      %1241 = vmatprep.subr.mxu0 %v1208
      %1242 = vmatpush1.msra.mxu0 %v1207
      %1243 = vmatprep.subr.mxu0 %v1204
      %1244 = vmatpush1.msra.mxu0 %v1203
      %1245 = vmatprep.subr.mxu0 %v1200
      %1246 = vmatpush1.msra.mxu0 %v1199
      %1247 = vmatprep.subr.mxu0 %v1196
      %1248 = vmatpush1.msra.mxu0 %v1195
      %1249 = vmatprep.subr.mxu0 %v1192
      %1250 = vmatpush1.msra.mxu0 %v1191
      %1251 = vmatprep.subr.mxu0 %v1188
      %1252 = vmatpush1.msra.mxu0 %v1187
      %1253 = vmatprep.subr.mxu0 %v1184
      %1254 = vmatpush1.msra.mxu0 %v1183
      %1255 = vmatprep.subr.mxu0 0.0
      %1256 = vmatpush2.msra.mxu0 0.0
      %1257 = vmatprep.subr.mxu0 0.0
      %1258 = vmatpush2.msra.mxu0 0.0
      %1259 = vmatprep.subr.mxu0 0.0
      %1260 = vmatpush2.msra.mxu0 0.0
      %1261 = vmatprep.subr.mxu0 0.0
      %1262 = vmatpush2.msra.mxu0 0.0
      %1263 = vmatprep.subr.mxu0 0.0
      %1264 = vmatpush2.msra.mxu0 0.0
      %1265 = vmatprep.subr.mxu0 0.0
      %1266 = vmatpush2.msra.mxu0 0.0
      %1267 = vmatprep.subr.mxu0 0.0
      %1268 = vmatpush2.msra.mxu0 0.0
      %1269 = vmatprep.subr.mxu0 0.0
      %1270 = vmatpush2.msra.mxu0 0.0
      %1271 = vmatprep.subr.mxu0 0.0
      %1272 = vmatpush2.msra.mxu0 0.0
      %1273 = vmatprep.subr.mxu0 0.0
      %1274 = vmatpush2.msra.mxu0 0.0
      %1275 = vmatprep.subr.mxu0 0.0
      %1276 = vmatpush2.msra.mxu0 0.0
      %1277 = vmatprep.subr.mxu0 0.0
      %1278 = vmatpush2.msra.mxu0 0.0
      %1279 = vmatprep.subr.mxu0 0.0
      %1280 = vmatpush2.msra.mxu0 0.0
      %1281 = vmatprep.subr.mxu0 0.0
      %1282 = vmatpush2.msra.mxu0 0.0
      %1283 = vmatprep.subr.mxu0 0.0
      %1284 = vmatpush2.msra.mxu0 0.0
      %1285 = vmatprep.subr.mxu0 0.0
      %1286 = vmatpush2.msra.mxu0 0.0
      %1287 = vmatprep.mubr.f32.mxu0 0.0
      %1288 = vmatmul.mubr.f32.gmra.mxu0 %v1221
      %v1289 = vpop.f32.mrf.mxu0
      %v1290 = vadd.f32 0.0, %v1289
      %v1291 = vpop.f32.mrf.mxu0
      %v1292 = vadd.f32 0.0, %v1291
      %1293 = vdwg.mxu0
      %1294 = vmatprep.subr.mxu0 0.0
      %1295 = vmatpush1.msra.mxu0 0.0
      %1296 = vmatprep.subr.mxu0 0.0
      %1297 = vmatpush1.msra.mxu0 0.0
      %1298 = vmatprep.subr.mxu0 0.0
      %1299 = vmatpush1.msra.mxu0 0.0
      %1300 = vmatprep.subr.mxu0 0.0
      %1301 = vmatpush1.msra.mxu0 0.0
      %1302 = vmatprep.subr.mxu0 0.0
      %1303 = vmatpush1.msra.mxu0 0.0
      %1304 = vmatprep.subr.mxu0 0.0
      %1305 = vmatpush1.msra.mxu0 0.0
      %1306 = vmatprep.subr.mxu0 0.0
      %1307 = vmatpush1.msra.mxu0 0.0
      %1308 = vmatprep.subr.mxu0 %v1218
      %1309 = vmatpush1.msra.mxu0 %v1217
      %1310 = vmatprep.subr.mxu0 %v1214
      %1311 = vmatpush1.msra.mxu0 %v1213
      %1312 = vmatprep.subr.mxu0 %v1210
      %1313 = vmatpush1.msra.mxu0 %v1209
      %1314 = vmatprep.subr.mxu0 %v1206
      %1315 = vmatpush1.msra.mxu0 %v1205
      %1316 = vmatprep.subr.mxu0 %v1202
      %1317 = vmatpush1.msra.mxu0 %v1201
      %1318 = vmatprep.subr.mxu0 %v1198
      %1319 = vmatpush1.msra.mxu0 %v1197
      %1320 = vmatprep.subr.mxu0 %v1194
      %1321 = vmatpush1.msra.mxu0 %v1193
      %1322 = vmatprep.subr.mxu0 %v1190
      %1323 = vmatpush1.msra.mxu0 %v1189
      %1324 = vmatprep.subr.mxu0 %v1186
      %1325 = vmatpush1.msra.mxu0 %v1185
      %1326 = vmatprep.subr.mxu0 0.0
      %1327 = vmatpush2.msra.mxu0 0.0
      %1328 = vmatprep.subr.mxu0 0.0
      %1329 = vmatpush2.msra.mxu0 0.0
      %1330 = vmatprep.subr.mxu0 0.0
      %1331 = vmatpush2.msra.mxu0 0.0
      %1332 = vmatprep.subr.mxu0 0.0
      %1333 = vmatpush2.msra.mxu0 0.0
      %1334 = vmatprep.subr.mxu0 0.0
      %1335 = vmatpush2.msra.mxu0 0.0
      %1336 = vmatprep.subr.mxu0 0.0
      %1337 = vmatpush2.msra.mxu0 0.0
      %1338 = vmatprep.subr.mxu0 0.0
      %1339 = vmatpush2.msra.mxu0 0.0
      %1340 = vmatprep.subr.mxu0 0.0
      %1341 = vmatpush2.msra.mxu0 0.0
      %1342 = vmatprep.subr.mxu0 0.0
      %1343 = vmatpush2.msra.mxu0 0.0
      %1344 = vmatprep.subr.mxu0 0.0
      %1345 = vmatpush2.msra.mxu0 0.0
      %1346 = vmatprep.subr.mxu0 0.0
      %1347 = vmatpush2.msra.mxu0 0.0
      %1348 = vmatprep.subr.mxu0 0.0
      %1349 = vmatpush2.msra.mxu0 0.0
      %1350 = vmatprep.subr.mxu0 0.0
      %1351 = vmatpush2.msra.mxu0 0.0
      %1352 = vmatprep.subr.mxu0 0.0
      %1353 = vmatpush2.msra.mxu0 0.0
      %1354 = vmatprep.subr.mxu0 0.0
      %1355 = vmatpush2.msra.mxu0 0.0
      %1356 = vmatprep.subr.mxu0 0.0
      %1357 = vmatpush2.msra.mxu0 0.0
      %1358 = vmatprep.mubr.f32.mxu0 0.0
      %1359 = vmatmul.mubr.f32.gmra.mxu0 %v1221
      %v1360 = vpop.f32.mrf.mxu0
      %v1361 = vadd.f32 0.0, %v1360
      %v1362 = vpop.f32.mrf.mxu0
      %v1363 = vadd.f32 0.0, %v1362
      %1364 = vdwg.mxu0
      %v1365 = vsel %vm645, %v1290, 0.0
      %v1366 = vsel %vm645, %v1292, 0.0
      %v1367 = vadd.f32 %v1365, %v1366
      %1368 = vadd.xlane.f32.xlu0 %v1367
      %v1369 = vpop.xlane.xlu0 %1368
      %v1370 = vmul.f32 %v1290, %v1290
      %v1371 = vmul.f32 %v1292, %v1292
      %v1372 = vsel %vm645, %v1370, 0.0
      %v1373 = vsel %vm645, %v1371, 0.0
      %v1374 = vadd.f32 %v1372, %v1373
      %1375 = vadd.xlane.f32.xlu0 %v1374
      %v1376 = vpop.xlane.xlu0 %1375
      %v1377 = vmul.f32 %v1369, 0.00390625
      %v1378 = vmul.f32 %v1376, 0.00390625
      %v1379 = vmul.f32 %v1377, %v1377
      %v1380 = vsub.f32 %v1378, %v1379
      %v1381 = vadd.f32 %v1380, 1e-05
      %v1382 = vrsqrt.pop %v1381
      %v1383 = vmul.f32 %v1290, %v1382
      %v1384 = vmul.f32 %v1292, %v1382
      %v1385 = vmul.f32 %v1377, %v1382
      %v1386 = vsub.f32 %v1383, %v1385
      %v1387 = vsub.f32 %v1384, %v1385
      %v1388 = vmax.f32 %v1386, 0.0
      %v1389 = vmax.f32 %v1387, 0.0
      %v1390 = vsel %vm645, %v1361, 0.0
      %v1391 = vsel %vm645, %v1363, 0.0
      %v1392 = vadd.f32 %v1390, %v1391
      %1393 = vadd.xlane.f32.xlu0 %v1392
      %v1394 = vpop.xlane.xlu0 %1393
      %v1395 = vmul.f32 %v1361, %v1361
      %v1396 = vmul.f32 %v1363, %v1363
      %v1397 = vsel %vm645, %v1395, 0.0
      %v1398 = vsel %vm645, %v1396, 0.0
      %v1399 = vadd.f32 %v1397, %v1398
      %1400 = vadd.xlane.f32.xlu0 %v1399
      %v1401 = vpop.xlane.xlu0 %1400
      %v1402 = vmul.f32 %v1394, 0.00390625
      %v1403 = vmul.f32 %v1401, 0.00390625
      %v1404 = vmul.f32 %v1402, %v1402
      %v1405 = vsub.f32 %v1403, %v1404
      %v1406 = vadd.f32 %v1405, 1e-05
      %v1407 = vrsqrt.pop %v1406
      %v1408 = vmul.f32 %v1361, %v1407
      %v1409 = vmul.f32 %v1363, %v1407
      %v1410 = vmul.f32 %v1402, %v1407
      %v1411 = vsub.f32 %v1408, %v1410
      %v1412 = vsub.f32 %v1409, %v1410
      %v1413 = vmax.f32 %v1411, 0.0
      %v1414 = vmax.f32 %v1412, 0.0
      %v1417 = vcombine.low %v1388, %v1389
      %1419 = vst [vmem:[%s204] sm:$0xff] %v1417
      %v1422 = vcombine.low %v1413, %v1414
      %s1424 = scalar_lea.vmem %s204, 8
      %1425 = vst [vmem:[%s1424] sm:$0xff] %v1422
      %s1426 = smul.u32 2, %s15
      %p1427 = scmp.lt.s32.totalorder %s1426, 3
      %s1428 = scalar_select %p1427, %s1426, 3
      %s1429 = smul.addr %s1428, 2
      %s1430 = smul.addr %s1429, 4
      %s1431 = scalar_lea.vmem %s4, %s1430
      // Predicated region
      $region37: #{con_block_2d.1} parent=35 // pred_check
        %p1432 = pneg %p122
      $region38: #{con_block_2d.1} parent=35 // pred_check_branch
        %1434 = sbr.rel (%p1432) target = $region40
      $region39: #{con_block_2d.1} parent=35 // pred_region
        %s1435 = smul.u32 2, %s15
      $region40: #{con_block_2d.1} parent=35 // pred_fallthru
        _
    $region36: #{con_block_2d.1} parent=5 // pred_fallthru
      _
    %p1436 = scmp.le.s32.totalorder 2, %s10
    // Predicated region
    $region41: #{con_block_2d.1} parent=5 // pred_check
      %p1437 = pneg %p1436
    $region42: #{con_block_2d.1} parent=5 // pred_check_branch
      %1439 = sbr.rel (%p1437) target = $region44
    $region43: #{con_block_2d.1} parent=5 // pred_region
      %s1440 = ssub.s32 %s10, 2
      // Predicated region
      $region45: #{con_block_2d.1} parent=43 // pred_check
        %p1441 = pneg %p128
      $region46: #{con_block_2d.1} parent=43 // pred_check_branch
        %1443 = sbr.rel (%p1441) target = $region48
      $region47: #{con_block_2d.1} parent=43 // pred_region
        %s1444 = smul.u32 2, %s16
        %p1445 = scmp.lt.s32.totalorder %s1444, 3
        %s1446 = scalar_select %p1445, %s1444, 3
        %s1447 = smul.addr %s1446, 2
        %s1448 = smul.addr %s1447, 4
        %s1449 = scalar_lea.vmem %s4, %s1448
      $region48: #{con_block_2d.1} parent=43 // pred_fallthru
        _
    $region44: #{con_block_2d.1} parent=5 // pred_fallthru
      _
  $region6: #{con_block_2d.1} parent=0 // loop_footer
    %s14 = sadd.s32 1, %s10
  $region7: #{con_block_2d.1} parent=0 // loop_footer_branch
    %9 = sbr.rel target = $region3
  $region8: #{con_block_2d.1} parent=0 // loop_exit
    _

</llo_original>
